<compile_context>
chip_gen: v7x
topology: tpu7x:2x2x1
jax: 0.10.0
libtpu: 0.0.40
codegen_flags: <defaults>
</compile_context>

<pallas_src>
import jax
import jax.numpy as jnp
from jax.experimental import pallas as pl
from jax.experimental.pallas import tpu as pltpu


def pos_enc_kernel(x_tab_ref, y_tab_ref, out_ref):
    """Writes one channel half of the (2*E, H*W) positional-encoding slab.

    x_tab_ref: (E, W) = xenc_weight[:W].T
    y_tab_ref: (E, H) = yenc_weight[:H].T
    out_ref  : (E, H*W) — x-half for grid step 0, y-half for grid step 1.
               Lane index l corresponds to the flattened (h, w): l = h*W + w.
    """
    e, hw = out_ref.shape
    w = x_tab_ref.shape[1]
    h = y_tab_ref.shape[1]

    # Flat lane index l = hi*W + wi, shared by both branches.
    lane = jax.lax.broadcasted_iota(jnp.int32, (1, hw), 1)

    half = pl.program_id(0)

    @pl.when(half == 0)
    def _x_half():
        # out[c, hi*W + wi] = x_tab[c, wi]: tile the (E, W) table W-periodically
        # along the lane axis.  Compute wi = lane % W without vector integer
        # division: grp = lane // W via a small compare-accumulate, then
        # wi = lane - grp*W.
        grp = jnp.zeros((1, hw), jnp.int32)
        for hi in range(1, h):
            grp = grp + (lane >= hi * w).astype(jnp.int32)
        wi_of_lane = lane - grp * w              # == lane % W, exactly
        xt = x_tab_ref[...]                      # (E, W)
        acc = jnp.zeros((e, hw), xt.dtype)
        for wi in range(w):
            acc = jnp.where(wi_of_lane == wi, xt[:, wi:wi + 1], acc)
        out_ref[...] = acc                       # dense, unmasked lane store

    @pl.when(half == 1)
    def _y_half():
        # out[c, hi*W + wi] = y_tab[c, hi]: each table column repeated W times
        # consecutively along the lane axis (simple range masks, no division).
        yt = y_tab_ref[...]                      # (E, H)
        acc = jnp.zeros((e, hw), yt.dtype)
        for hi in range(h):
            lo = hi * w
            in_row = (lane >= lo) & (lane < lo + w)
            acc = jnp.where(in_row, yt[:, hi:hi + 1], acc)
        out_ref[...] = acc                       # dense, unmasked lane store


def learned_pos_encoding(x, xenc_weight, yenc_weight):
    """x: (B, C, H, W) (values unused); xenc/yenc_weight: (num_embeddings, E).

    Returns pos of shape (B, 2*E, H, W), float-dtype of the tables.
    """
    B, _, H, W = x.shape
    n, E = xenc_weight.shape
    assert W <= n and H <= n, "spatial dims must not exceed num_embeddings"
    assert E % 8 == 0, "E must be a multiple of 8 for the per-half block"

    # Pre-slice + transpose the tables so the kernel sees exactly what it needs
    # (channels on the sublane axis, no padded 50->128 lane DMA).
    x_tab = jnp.transpose(xenc_weight[:W])   # (E, W)
    y_tab = jnp.transpose(yenc_weight[:H])   # (E, H)

    # Single batch-invariant, lane-dense slab: (2*E, H*W).
    slab = pl.pallas_call(
        pos_enc_kernel,
        out_shape=jax.ShapeDtypeStruct((2 * E, H * W), xenc_weight.dtype),
        grid=(2,),  # one step per channel half; shardable across v7x's 2 TCs
        in_specs=[
            pl.BlockSpec((E, W), lambda i: (0, 0)),
            pl.BlockSpec((E, H), lambda i: (0, 0)),
        ],
        out_specs=pl.BlockSpec((E, H * W), lambda i: (i, 0)),
        compiler_params=pltpu.CompilerParams(
            dimension_semantics=("parallel",)),
    )(x_tab, y_tab)

    # Free, contiguous reshape back to NCHW channel planes, then broadcast over
    # batch lazily (fuses into the downstream `features + pos` add in DETR
    # instead of materializing B redundant HBM copies inside the kernel).
    pos = slab.reshape(2 * E, H, W)
    return jnp.broadcast_to(pos[None], (B, 2 * E, H, W))


def ref_pos_encoding(x, xenc_weight, yenc_weight):
    """Pure-JAX reference mirroring the PyTorch forward exactly."""
    B, _, H, W = x.shape
    E = xenc_weight.shape[1]
    x_pos = xenc_weight[:W]                          # (W, E)
    y_pos = yenc_weight[:H]                          # (H, E)
    pos = jnp.concatenate(
        [jnp.broadcast_to(x_pos[None, :, :], (H, W, E)),
         jnp.broadcast_to(y_pos[:, None, :], (H, W, E))], axis=-1)  # (H, W, 2E)
    pos = jnp.transpose(pos, (2, 0, 1))[None]        # (1, 2E, H, W)
    return jnp.broadcast_to(pos, (B, 2 * E, H, W))


if __name__ == "__main__":
    # Small, module-consistent shapes.
    B, C, H, W = 2, 4, 16, 16
    in_features = 50          # nn.Embedding(in_features, feature_encoding)
    feature_encoding = 32     # E ; output channels = 2*E = 64 ; H*W = 256 lanes

    key = jax.random.PRNGKey(0)
    kx, ky, kinp = jax.random.split(key, 3)
    xenc_w = jax.random.normal(kx, (in_features, feature_encoding), jnp.float32)
    yenc_w = jax.random.normal(ky, (in_features, feature_encoding), jnp.float32)
    x = jax.random.normal(kinp, (B, C, H, W), jnp.float32)

    out = learned_pos_encoding(x, xenc_w, yenc_w)
    out = jax.block_until_ready(out)

    ref = ref_pos_encoding(x, xenc_w, yenc_w)
    assert out.shape == (B, 2 * feature_encoding, H, W)
    assert out.dtype == jnp.float32
    assert jnp.allclose(out, ref), "Pallas output does not match reference"

    print("KERNEL_OK")
</pallas_src>

<mosaic_0001>
module attributes {stable_mosaic.version = 11 : i64} {
  func.func @pos_enc_kernel(%arg0: i32, %arg1: memref<32x16xf32, #tpu.memory_space<vmem>>, %arg2: memref<32x16xf32, #tpu.memory_space<vmem>>, %arg3: memref<32x256xf32, #tpu.memory_space<vmem>>) attributes {dimension_semantics = [#tpu.dimension_semantics<parallel>], iteration_bounds = array<i64: 2>, scalar_prefetch = 0 : i64, scratch_operands = 0 : i64, tpu.core_type = #tpu.core_type<tc>, window_params = [{pipeline_mode = #tpu.pipeline_mode<synchronous>, transform_indices = @transform_0, window_bounds = array<i64: 32, 16>}, {pipeline_mode = #tpu.pipeline_mode<synchronous>, transform_indices = @transform_1, window_bounds = array<i64: 32, 16>}, {transform_indices = @transform_2, window_bounds = array<i64: 32, 256>}]} {
    %0 = tpu.iota {dimensions = array<i32: 1>} : vector<1x256xi32>
    %c0_i32 = arith.constant 0 : i32
    %1 = arith.cmpi eq, %arg0, %c0_i32 : i32
    %2 = arith.extui %1 : i1 to i32
    %c0_i32_0 = arith.constant 0 : i32
    %3 = arith.cmpi ne, %2, %c0_i32_0 : i32
    scf.if %3 {
      %c0_i32_2 = arith.constant 0 : i32
      %7 = vector.broadcast %c0_i32_2 : i32 to vector<1x256xi32>
      %c16_i32 = arith.constant 16 : i32
      %8 = vector.broadcast %c16_i32 : i32 to vector<1x256xi32>
      %9 = arith.cmpi sge, %0, %8 : vector<1x256xi32>
      %10 = arith.extui %9 : vector<1x256xi1> to vector<1x256xi32>
      %11 = arith.addi %7, %10 : vector<1x256xi32>
      %c32_i32 = arith.constant 32 : i32
      %12 = vector.broadcast %c32_i32 : i32 to vector<1x256xi32>
      %13 = arith.cmpi sge, %0, %12 : vector<1x256xi32>
      %14 = arith.extui %13 : vector<1x256xi1> to vector<1x256xi32>
      %15 = arith.addi %11, %14 : vector<1x256xi32>
      %c48_i32 = arith.constant 48 : i32
      %16 = vector.broadcast %c48_i32 : i32 to vector<1x256xi32>
      %17 = arith.cmpi sge, %0, %16 : vector<1x256xi32>
      %18 = arith.extui %17 : vector<1x256xi1> to vector<1x256xi32>
      %19 = arith.addi %15, %18 : vector<1x256xi32>
      %c64_i32 = arith.constant 64 : i32
      %20 = vector.broadcast %c64_i32 : i32 to vector<1x256xi32>
      %21 = arith.cmpi sge, %0, %20 : vector<1x256xi32>
      %22 = arith.extui %21 : vector<1x256xi1> to vector<1x256xi32>
      %23 = arith.addi %19, %22 : vector<1x256xi32>
      %c80_i32 = arith.constant 80 : i32
      %24 = vector.broadcast %c80_i32 : i32 to vector<1x256xi32>
      %25 = arith.cmpi sge, %0, %24 : vector<1x256xi32>
      %26 = arith.extui %25 : vector<1x256xi1> to vector<1x256xi32>
      %27 = arith.addi %23, %26 : vector<1x256xi32>
      %c96_i32 = arith.constant 96 : i32
      %28 = vector.broadcast %c96_i32 : i32 to vector<1x256xi32>
      %29 = arith.cmpi sge, %0, %28 : vector<1x256xi32>
      %30 = arith.extui %29 : vector<1x256xi1> to vector<1x256xi32>
      %31 = arith.addi %27, %30 : vector<1x256xi32>
      %c112_i32 = arith.constant 112 : i32
      %32 = vector.broadcast %c112_i32 : i32 to vector<1x256xi32>
      %33 = arith.cmpi sge, %0, %32 : vector<1x256xi32>
      %34 = arith.extui %33 : vector<1x256xi1> to vector<1x256xi32>
      %35 = arith.addi %31, %34 : vector<1x256xi32>
      %c128_i32 = arith.constant 128 : i32
      %36 = vector.broadcast %c128_i32 : i32 to vector<1x256xi32>
      %37 = arith.cmpi sge, %0, %36 : vector<1x256xi32>
      %38 = arith.extui %37 : vector<1x256xi1> to vector<1x256xi32>
      %39 = arith.addi %35, %38 : vector<1x256xi32>
      %c144_i32 = arith.constant 144 : i32
      %40 = vector.broadcast %c144_i32 : i32 to vector<1x256xi32>
      %41 = arith.cmpi sge, %0, %40 : vector<1x256xi32>
      %42 = arith.extui %41 : vector<1x256xi1> to vector<1x256xi32>
      %43 = arith.addi %39, %42 : vector<1x256xi32>
      %c160_i32 = arith.constant 160 : i32
      %44 = vector.broadcast %c160_i32 : i32 to vector<1x256xi32>
      %45 = arith.cmpi sge, %0, %44 : vector<1x256xi32>
      %46 = arith.extui %45 : vector<1x256xi1> to vector<1x256xi32>
      %47 = arith.addi %43, %46 : vector<1x256xi32>
      %c176_i32 = arith.constant 176 : i32
      %48 = vector.broadcast %c176_i32 : i32 to vector<1x256xi32>
      %49 = arith.cmpi sge, %0, %48 : vector<1x256xi32>
      %50 = arith.extui %49 : vector<1x256xi1> to vector<1x256xi32>
      %51 = arith.addi %47, %50 : vector<1x256xi32>
      %c192_i32 = arith.constant 192 : i32
      %52 = vector.broadcast %c192_i32 : i32 to vector<1x256xi32>
      %53 = arith.cmpi sge, %0, %52 : vector<1x256xi32>
      %54 = arith.extui %53 : vector<1x256xi1> to vector<1x256xi32>
      %55 = arith.addi %51, %54 : vector<1x256xi32>
      %c208_i32 = arith.constant 208 : i32
      %56 = vector.broadcast %c208_i32 : i32 to vector<1x256xi32>
      %57 = arith.cmpi sge, %0, %56 : vector<1x256xi32>
      %58 = arith.extui %57 : vector<1x256xi1> to vector<1x256xi32>
      %59 = arith.addi %55, %58 : vector<1x256xi32>
      %c224_i32 = arith.constant 224 : i32
      %60 = vector.broadcast %c224_i32 : i32 to vector<1x256xi32>
      %61 = arith.cmpi sge, %0, %60 : vector<1x256xi32>
      %62 = arith.extui %61 : vector<1x256xi1> to vector<1x256xi32>
      %63 = arith.addi %59, %62 : vector<1x256xi32>
      %c240_i32 = arith.constant 240 : i32
      %64 = vector.broadcast %c240_i32 : i32 to vector<1x256xi32>
      %65 = arith.cmpi sge, %0, %64 : vector<1x256xi32>
      %66 = arith.extui %65 : vector<1x256xi1> to vector<1x256xi32>
      %67 = arith.addi %63, %66 : vector<1x256xi32>
      %c16_i32_3 = arith.constant 16 : i32
      %68 = vector.broadcast %c16_i32_3 : i32 to vector<1x256xi32>
      %69 = arith.muli %67, %68 : vector<1x256xi32>
      %70 = arith.subi %0, %69 : vector<1x256xi32>
      %c0 = arith.constant 0 : index
      %c0_4 = arith.constant 0 : index
      %71 = vector.load %arg1[%c0, %c0_4] : memref<32x16xf32, #tpu.memory_space<vmem>>, vector<32x16xf32>
      %cst = arith.constant 0.000000e+00 : f32
      %72 = vector.broadcast %cst : f32 to vector<32x256xf32>
      %c0_i32_5 = arith.constant 0 : i32
      %73 = vector.broadcast %c0_i32_5 : i32 to vector<1x256xi32>
      %74 = arith.cmpi eq, %70, %73 : vector<1x256xi32>
      %75 = vector.extract_strided_slice %71 {offsets = [0, 0], sizes = [32, 1], strides = [1, 1]} : vector<32x16xf32> to vector<32x1xf32>
      %76 = vector.shape_cast %74 : vector<1x256xi1> to vector<1x256xi1>
      %77 = vector.broadcast %76 : vector<1x256xi1> to vector<32x256xi1>
      %78 = vector.shape_cast %75 : vector<32x1xf32> to vector<32x1xf32>
      %79 = vector.broadcast %78 : vector<32x1xf32> to vector<32x256xf32>
      %80 = arith.select %77, %79, %72 : vector<32x256xi1>, vector<32x256xf32>
      %c1_i32_6 = arith.constant 1 : i32
      %81 = vector.broadcast %c1_i32_6 : i32 to vector<1x256xi32>
      %82 = arith.cmpi eq, %70, %81 : vector<1x256xi32>
      %83 = vector.extract_strided_slice %71 {offsets = [0, 1], sizes = [32, 1], strides = [1, 1]} : vector<32x16xf32> to vector<32x1xf32>
      %84 = vector.shape_cast %82 : vector<1x256xi1> to vector<1x256xi1>
      %85 = vector.broadcast %84 : vector<1x256xi1> to vector<32x256xi1>
      %86 = vector.shape_cast %83 : vector<32x1xf32> to vector<32x1xf32>
      %87 = vector.broadcast %86 : vector<32x1xf32> to vector<32x256xf32>
      %88 = arith.select %85, %87, %80 : vector<32x256xi1>, vector<32x256xf32>
      %c2_i32 = arith.constant 2 : i32
      %89 = vector.broadcast %c2_i32 : i32 to vector<1x256xi32>
      %90 = arith.cmpi eq, %70, %89 : vector<1x256xi32>
      %91 = vector.extract_strided_slice %71 {offsets = [0, 2], sizes = [32, 1], strides = [1, 1]} : vector<32x16xf32> to vector<32x1xf32>
      %92 = vector.shape_cast %90 : vector<1x256xi1> to vector<1x256xi1>
      %93 = vector.broadcast %92 : vector<1x256xi1> to vector<32x256xi1>
      %94 = vector.shape_cast %91 : vector<32x1xf32> to vector<32x1xf32>
      %95 = vector.broadcast %94 : vector<32x1xf32> to vector<32x256xf32>
      %96 = arith.select %93, %95, %88 : vector<32x256xi1>, vector<32x256xf32>
      %c3_i32 = arith.constant 3 : i32
      %97 = vector.broadcast %c3_i32 : i32 to vector<1x256xi32>
      %98 = arith.cmpi eq, %70, %97 : vector<1x256xi32>
      %99 = vector.extract_strided_slice %71 {offsets = [0, 3], sizes = [32, 1], strides = [1, 1]} : vector<32x16xf32> to vector<32x1xf32>
      %100 = vector.shape_cast %98 : vector<1x256xi1> to vector<1x256xi1>
      %101 = vector.broadcast %100 : vector<1x256xi1> to vector<32x256xi1>
      %102 = vector.shape_cast %99 : vector<32x1xf32> to vector<32x1xf32>
      %103 = vector.broadcast %102 : vector<32x1xf32> to vector<32x256xf32>
      %104 = arith.select %101, %103, %96 : vector<32x256xi1>, vector<32x256xf32>
      %c4_i32 = arith.constant 4 : i32
      %105 = vector.broadcast %c4_i32 : i32 to vector<1x256xi32>
      %106 = arith.cmpi eq, %70, %105 : vector<1x256xi32>
      %107 = vector.extract_strided_slice %71 {offsets = [0, 4], sizes = [32, 1], strides = [1, 1]} : vector<32x16xf32> to vector<32x1xf32>
      %108 = vector.shape_cast %106 : vector<1x256xi1> to vector<1x256xi1>
      %109 = vector.broadcast %108 : vector<1x256xi1> to vector<32x256xi1>
      %110 = vector.shape_cast %107 : vector<32x1xf32> to vector<32x1xf32>
      %111 = vector.broadcast %110 : vector<32x1xf32> to vector<32x256xf32>
      %112 = arith.select %109, %111, %104 : vector<32x256xi1>, vector<32x256xf32>
      %c5_i32 = arith.constant 5 : i32
      %113 = vector.broadcast %c5_i32 : i32 to vector<1x256xi32>
      %114 = arith.cmpi eq, %70, %113 : vector<1x256xi32>
      %115 = vector.extract_strided_slice %71 {offsets = [0, 5], sizes = [32, 1], strides = [1, 1]} : vector<32x16xf32> to vector<32x1xf32>
      %116 = vector.shape_cast %114 : vector<1x256xi1> to vector<1x256xi1>
      %117 = vector.broadcast %116 : vector<1x256xi1> to vector<32x256xi1>
      %118 = vector.shape_cast %115 : vector<32x1xf32> to vector<32x1xf32>
      %119 = vector.broadcast %118 : vector<32x1xf32> to vector<32x256xf32>
      %120 = arith.select %117, %119, %112 : vector<32x256xi1>, vector<32x256xf32>
      %c6_i32 = arith.constant 6 : i32
      %121 = vector.broadcast %c6_i32 : i32 to vector<1x256xi32>
      %122 = arith.cmpi eq, %70, %121 : vector<1x256xi32>
      %123 = vector.extract_strided_slice %71 {offsets = [0, 6], sizes = [32, 1], strides = [1, 1]} : vector<32x16xf32> to vector<32x1xf32>
      %124 = vector.shape_cast %122 : vector<1x256xi1> to vector<1x256xi1>
      %125 = vector.broadcast %124 : vector<1x256xi1> to vector<32x256xi1>
      %126 = vector.shape_cast %123 : vector<32x1xf32> to vector<32x1xf32>
      %127 = vector.broadcast %126 : vector<32x1xf32> to vector<32x256xf32>
      %128 = arith.select %125, %127, %120 : vector<32x256xi1>, vector<32x256xf32>
      %c7_i32 = arith.constant 7 : i32
      %129 = vector.broadcast %c7_i32 : i32 to vector<1x256xi32>
      %130 = arith.cmpi eq, %70, %129 : vector<1x256xi32>
      %131 = vector.extract_strided_slice %71 {offsets = [0, 7], sizes = [32, 1], strides = [1, 1]} : vector<32x16xf32> to vector<32x1xf32>
      %132 = vector.shape_cast %130 : vector<1x256xi1> to vector<1x256xi1>
      %133 = vector.broadcast %132 : vector<1x256xi1> to vector<32x256xi1>
      %134 = vector.shape_cast %131 : vector<32x1xf32> to vector<32x1xf32>
      %135 = vector.broadcast %134 : vector<32x1xf32> to vector<32x256xf32>
      %136 = arith.select %133, %135, %128 : vector<32x256xi1>, vector<32x256xf32>
      %c8_i32 = arith.constant 8 : i32
      %137 = vector.broadcast %c8_i32 : i32 to vector<1x256xi32>
      %138 = arith.cmpi eq, %70, %137 : vector<1x256xi32>
      %139 = vector.extract_strided_slice %71 {offsets = [0, 8], sizes = [32, 1], strides = [1, 1]} : vector<32x16xf32> to vector<32x1xf32>
      %140 = vector.shape_cast %138 : vector<1x256xi1> to vector<1x256xi1>
      %141 = vector.broadcast %140 : vector<1x256xi1> to vector<32x256xi1>
      %142 = vector.shape_cast %139 : vector<32x1xf32> to vector<32x1xf32>
      %143 = vector.broadcast %142 : vector<32x1xf32> to vector<32x256xf32>
      %144 = arith.select %141, %143, %136 : vector<32x256xi1>, vector<32x256xf32>
      %c9_i32 = arith.constant 9 : i32
      %145 = vector.broadcast %c9_i32 : i32 to vector<1x256xi32>
      %146 = arith.cmpi eq, %70, %145 : vector<1x256xi32>
      %147 = vector.extract_strided_slice %71 {offsets = [0, 9], sizes = [32, 1], strides = [1, 1]} : vector<32x16xf32> to vector<32x1xf32>
      %148 = vector.shape_cast %146 : vector<1x256xi1> to vector<1x256xi1>
      %149 = vector.broadcast %148 : vector<1x256xi1> to vector<32x256xi1>
      %150 = vector.shape_cast %147 : vector<32x1xf32> to vector<32x1xf32>
      %151 = vector.broadcast %150 : vector<32x1xf32> to vector<32x256xf32>
      %152 = arith.select %149, %151, %144 : vector<32x256xi1>, vector<32x256xf32>
      %c10_i32 = arith.constant 10 : i32
      %153 = vector.broadcast %c10_i32 : i32 to vector<1x256xi32>
      %154 = arith.cmpi eq, %70, %153 : vector<1x256xi32>
      %155 = vector.extract_strided_slice %71 {offsets = [0, 10], sizes = [32, 1], strides = [1, 1]} : vector<32x16xf32> to vector<32x1xf32>
      %156 = vector.shape_cast %154 : vector<1x256xi1> to vector<1x256xi1>
      %157 = vector.broadcast %156 : vector<1x256xi1> to vector<32x256xi1>
      %158 = vector.shape_cast %155 : vector<32x1xf32> to vector<32x1xf32>
      %159 = vector.broadcast %158 : vector<32x1xf32> to vector<32x256xf32>
      %160 = arith.select %157, %159, %152 : vector<32x256xi1>, vector<32x256xf32>
      %c11_i32 = arith.constant 11 : i32
      %161 = vector.broadcast %c11_i32 : i32 to vector<1x256xi32>
      %162 = arith.cmpi eq, %70, %161 : vector<1x256xi32>
      %163 = vector.extract_strided_slice %71 {offsets = [0, 11], sizes = [32, 1], strides = [1, 1]} : vector<32x16xf32> to vector<32x1xf32>
      %164 = vector.shape_cast %162 : vector<1x256xi1> to vector<1x256xi1>
      %165 = vector.broadcast %164 : vector<1x256xi1> to vector<32x256xi1>
      %166 = vector.shape_cast %163 : vector<32x1xf32> to vector<32x1xf32>
      %167 = vector.broadcast %166 : vector<32x1xf32> to vector<32x256xf32>
      %168 = arith.select %165, %167, %160 : vector<32x256xi1>, vector<32x256xf32>
      %c12_i32 = arith.constant 12 : i32
      %169 = vector.broadcast %c12_i32 : i32 to vector<1x256xi32>
      %170 = arith.cmpi eq, %70, %169 : vector<1x256xi32>
      %171 = vector.extract_strided_slice %71 {offsets = [0, 12], sizes = [32, 1], strides = [1, 1]} : vector<32x16xf32> to vector<32x1xf32>
      %172 = vector.shape_cast %170 : vector<1x256xi1> to vector<1x256xi1>
      %173 = vector.broadcast %172 : vector<1x256xi1> to vector<32x256xi1>
      %174 = vector.shape_cast %171 : vector<32x1xf32> to vector<32x1xf32>
      %175 = vector.broadcast %174 : vector<32x1xf32> to vector<32x256xf32>
      %176 = arith.select %173, %175, %168 : vector<32x256xi1>, vector<32x256xf32>
      %c13_i32 = arith.constant 13 : i32
      %177 = vector.broadcast %c13_i32 : i32 to vector<1x256xi32>
      %178 = arith.cmpi eq, %70, %177 : vector<1x256xi32>
      %179 = vector.extract_strided_slice %71 {offsets = [0, 13], sizes = [32, 1], strides = [1, 1]} : vector<32x16xf32> to vector<32x1xf32>
      %180 = vector.shape_cast %178 : vector<1x256xi1> to vector<1x256xi1>
      %181 = vector.broadcast %180 : vector<1x256xi1> to vector<32x256xi1>
      %182 = vector.shape_cast %179 : vector<32x1xf32> to vector<32x1xf32>
      %183 = vector.broadcast %182 : vector<32x1xf32> to vector<32x256xf32>
      %184 = arith.select %181, %183, %176 : vector<32x256xi1>, vector<32x256xf32>
      %c14_i32 = arith.constant 14 : i32
      %185 = vector.broadcast %c14_i32 : i32 to vector<1x256xi32>
      %186 = arith.cmpi eq, %70, %185 : vector<1x256xi32>
      %187 = vector.extract_strided_slice %71 {offsets = [0, 14], sizes = [32, 1], strides = [1, 1]} : vector<32x16xf32> to vector<32x1xf32>
      %188 = vector.shape_cast %186 : vector<1x256xi1> to vector<1x256xi1>
      %189 = vector.broadcast %188 : vector<1x256xi1> to vector<32x256xi1>
      %190 = vector.shape_cast %187 : vector<32x1xf32> to vector<32x1xf32>
      %191 = vector.broadcast %190 : vector<32x1xf32> to vector<32x256xf32>
      %192 = arith.select %189, %191, %184 : vector<32x256xi1>, vector<32x256xf32>
      %c15_i32 = arith.constant 15 : i32
      %193 = vector.broadcast %c15_i32 : i32 to vector<1x256xi32>
      %194 = arith.cmpi eq, %70, %193 : vector<1x256xi32>
      %195 = vector.extract_strided_slice %71 {offsets = [0, 15], sizes = [32, 1], strides = [1, 1]} : vector<32x16xf32> to vector<32x1xf32>
      %196 = vector.shape_cast %194 : vector<1x256xi1> to vector<1x256xi1>
      %197 = vector.broadcast %196 : vector<1x256xi1> to vector<32x256xi1>
      %198 = vector.shape_cast %195 : vector<32x1xf32> to vector<32x1xf32>
      %199 = vector.broadcast %198 : vector<32x1xf32> to vector<32x256xf32>
      %200 = arith.select %197, %199, %192 : vector<32x256xi1>, vector<32x256xf32>
      %c0_7 = arith.constant 0 : index
      %c0_8 = arith.constant 0 : index
      %201 = vector.load %arg3[%c0_7, %c0_8] : memref<32x256xf32, #tpu.memory_space<vmem>>, vector<32x256xf32>
      tpu.vector_store %arg3[%c0_7, %c0_8], %200 {strides = array<i32>} : memref<32x256xf32, #tpu.memory_space<vmem>>, vector<32x256xf32>,
    } else {
    }
    %c1_i32 = arith.constant 1 : i32
    %4 = arith.cmpi eq, %arg0, %c1_i32 : i32
    %5 = arith.extui %4 : i1 to i32
    %c0_i32_1 = arith.constant 0 : i32
    %6 = arith.cmpi ne, %5, %c0_i32_1 : i32
    scf.if %6 {
      %c0 = arith.constant 0 : index
      %c0_2 = arith.constant 0 : index
      %7 = vector.load %arg2[%c0, %c0_2] : memref<32x16xf32, #tpu.memory_space<vmem>>, vector<32x16xf32>
      %cst = arith.constant 0.000000e+00 : f32
      %8 = vector.broadcast %cst : f32 to vector<32x256xf32>
      %c0_i32_3 = arith.constant 0 : i32
      %9 = vector.broadcast %c0_i32_3 : i32 to vector<1x256xi32>
      %10 = arith.cmpi sge, %0, %9 : vector<1x256xi32>
      %c16_i32 = arith.constant 16 : i32
      %11 = vector.broadcast %c16_i32 : i32 to vector<1x256xi32>
      %12 = arith.cmpi slt, %0, %11 : vector<1x256xi32>
      %13 = arith.andi %10, %12 : vector<1x256xi1>
      %14 = vector.extract_strided_slice %7 {offsets = [0, 0], sizes = [32, 1], strides = [1, 1]} : vector<32x16xf32> to vector<32x1xf32>
      %15 = vector.shape_cast %13 : vector<1x256xi1> to vector<1x256xi1>
      %16 = vector.broadcast %15 : vector<1x256xi1> to vector<32x256xi1>
      %17 = vector.shape_cast %14 : vector<32x1xf32> to vector<32x1xf32>
      %18 = vector.broadcast %17 : vector<32x1xf32> to vector<32x256xf32>
      %19 = arith.select %16, %18, %8 : vector<32x256xi1>, vector<32x256xf32>
      %c16_i32_4 = arith.constant 16 : i32
      %20 = vector.broadcast %c16_i32_4 : i32 to vector<1x256xi32>
      %21 = arith.cmpi sge, %0, %20 : vector<1x256xi32>
      %c32_i32 = arith.constant 32 : i32
      %22 = vector.broadcast %c32_i32 : i32 to vector<1x256xi32>
      %23 = arith.cmpi slt, %0, %22 : vector<1x256xi32>
      %24 = arith.andi %21, %23 : vector<1x256xi1>
      %25 = vector.extract_strided_slice %7 {offsets = [0, 1], sizes = [32, 1], strides = [1, 1]} : vector<32x16xf32> to vector<32x1xf32>
      %26 = vector.shape_cast %24 : vector<1x256xi1> to vector<1x256xi1>
      %27 = vector.broadcast %26 : vector<1x256xi1> to vector<32x256xi1>
      %28 = vector.shape_cast %25 : vector<32x1xf32> to vector<32x1xf32>
      %29 = vector.broadcast %28 : vector<32x1xf32> to vector<32x256xf32>
      %30 = arith.select %27, %29, %19 : vector<32x256xi1>, vector<32x256xf32>
      %c32_i32_5 = arith.constant 32 : i32
      %31 = vector.broadcast %c32_i32_5 : i32 to vector<1x256xi32>
      %32 = arith.cmpi sge, %0, %31 : vector<1x256xi32>
      %c48_i32 = arith.constant 48 : i32
      %33 = vector.broadcast %c48_i32 : i32 to vector<1x256xi32>
      %34 = arith.cmpi slt, %0, %33 : vector<1x256xi32>
      %35 = arith.andi %32, %34 : vector<1x256xi1>
      %36 = vector.extract_strided_slice %7 {offsets = [0, 2], sizes = [32, 1], strides = [1, 1]} : vector<32x16xf32> to vector<32x1xf32>
      %37 = vector.shape_cast %35 : vector<1x256xi1> to vector<1x256xi1>
      %38 = vector.broadcast %37 : vector<1x256xi1> to vector<32x256xi1>
      %39 = vector.shape_cast %36 : vector<32x1xf32> to vector<32x1xf32>
      %40 = vector.broadcast %39 : vector<32x1xf32> to vector<32x256xf32>
      %41 = arith.select %38, %40, %30 : vector<32x256xi1>, vector<32x256xf32>
      %c48_i32_6 = arith.constant 48 : i32
      %42 = vector.broadcast %c48_i32_6 : i32 to vector<1x256xi32>
      %43 = arith.cmpi sge, %0, %42 : vector<1x256xi32>
      %c64_i32 = arith.constant 64 : i32
      %44 = vector.broadcast %c64_i32 : i32 to vector<1x256xi32>
      %45 = arith.cmpi slt, %0, %44 : vector<1x256xi32>
      %46 = arith.andi %43, %45 : vector<1x256xi1>
      %47 = vector.extract_strided_slice %7 {offsets = [0, 3], sizes = [32, 1], strides = [1, 1]} : vector<32x16xf32> to vector<32x1xf32>
      %48 = vector.shape_cast %46 : vector<1x256xi1> to vector<1x256xi1>
      %49 = vector.broadcast %48 : vector<1x256xi1> to vector<32x256xi1>
      %50 = vector.shape_cast %47 : vector<32x1xf32> to vector<32x1xf32>
      %51 = vector.broadcast %50 : vector<32x1xf32> to vector<32x256xf32>
      %52 = arith.select %49, %51, %41 : vector<32x256xi1>, vector<32x256xf32>
      %c64_i32_7 = arith.constant 64 : i32
      %53 = vector.broadcast %c64_i32_7 : i32 to vector<1x256xi32>
      %54 = arith.cmpi sge, %0, %53 : vector<1x256xi32>
      %c80_i32 = arith.constant 80 : i32
      %55 = vector.broadcast %c80_i32 : i32 to vector<1x256xi32>
      %56 = arith.cmpi slt, %0, %55 : vector<1x256xi32>
      %57 = arith.andi %54, %56 : vector<1x256xi1>
      %58 = vector.extract_strided_slice %7 {offsets = [0, 4], sizes = [32, 1], strides = [1, 1]} : vector<32x16xf32> to vector<32x1xf32>
      %59 = vector.shape_cast %57 : vector<1x256xi1> to vector<1x256xi1>
      %60 = vector.broadcast %59 : vector<1x256xi1> to vector<32x256xi1>
      %61 = vector.shape_cast %58 : vector<32x1xf32> to vector<32x1xf32>
      %62 = vector.broadcast %61 : vector<32x1xf32> to vector<32x256xf32>
      %63 = arith.select %60, %62, %52 : vector<32x256xi1>, vector<32x256xf32>
      %c80_i32_8 = arith.constant 80 : i32
      %64 = vector.broadcast %c80_i32_8 : i32 to vector<1x256xi32>
      %65 = arith.cmpi sge, %0, %64 : vector<1x256xi32>
      %c96_i32 = arith.constant 96 : i32
      %66 = vector.broadcast %c96_i32 : i32 to vector<1x256xi32>
      %67 = arith.cmpi slt, %0, %66 : vector<1x256xi32>
      %68 = arith.andi %65, %67 : vector<1x256xi1>
      %69 = vector.extract_strided_slice %7 {offsets = [0, 5], sizes = [32, 1], strides = [1, 1]} : vector<32x16xf32> to vector<32x1xf32>
      %70 = vector.shape_cast %68 : vector<1x256xi1> to vector<1x256xi1>
      %71 = vector.broadcast %70 : vector<1x256xi1> to vector<32x256xi1>
      %72 = vector.shape_cast %69 : vector<32x1xf32> to vector<32x1xf32>
      %73 = vector.broadcast %72 : vector<32x1xf32> to vector<32x256xf32>
      %74 = arith.select %71, %73, %63 : vector<32x256xi1>, vector<32x256xf32>
      %c96_i32_9 = arith.constant 96 : i32
      %75 = vector.broadcast %c96_i32_9 : i32 to vector<1x256xi32>
      %76 = arith.cmpi sge, %0, %75 : vector<1x256xi32>
      %c112_i32 = arith.constant 112 : i32
      %77 = vector.broadcast %c112_i32 : i32 to vector<1x256xi32>
      %78 = arith.cmpi slt, %0, %77 : vector<1x256xi32>
      %79 = arith.andi %76, %78 : vector<1x256xi1>
      %80 = vector.extract_strided_slice %7 {offsets = [0, 6], sizes = [32, 1], strides = [1, 1]} : vector<32x16xf32> to vector<32x1xf32>
      %81 = vector.shape_cast %79 : vector<1x256xi1> to vector<1x256xi1>
      %82 = vector.broadcast %81 : vector<1x256xi1> to vector<32x256xi1>
      %83 = vector.shape_cast %80 : vector<32x1xf32> to vector<32x1xf32>
      %84 = vector.broadcast %83 : vector<32x1xf32> to vector<32x256xf32>
      %85 = arith.select %82, %84, %74 : vector<32x256xi1>, vector<32x256xf32>
      %c112_i32_10 = arith.constant 112 : i32
      %86 = vector.broadcast %c112_i32_10 : i32 to vector<1x256xi32>
      %87 = arith.cmpi sge, %0, %86 : vector<1x256xi32>
      %c128_i32 = arith.constant 128 : i32
      %88 = vector.broadcast %c128_i32 : i32 to vector<1x256xi32>
      %89 = arith.cmpi slt, %0, %88 : vector<1x256xi32>
      %90 = arith.andi %87, %89 : vector<1x256xi1>
      %91 = vector.extract_strided_slice %7 {offsets = [0, 7], sizes = [32, 1], strides = [1, 1]} : vector<32x16xf32> to vector<32x1xf32>
      %92 = vector.shape_cast %90 : vector<1x256xi1> to vector<1x256xi1>
      %93 = vector.broadcast %92 : vector<1x256xi1> to vector<32x256xi1>
      %94 = vector.shape_cast %91 : vector<32x1xf32> to vector<32x1xf32>
      %95 = vector.broadcast %94 : vector<32x1xf32> to vector<32x256xf32>
      %96 = arith.select %93, %95, %85 : vector<32x256xi1>, vector<32x256xf32>
      %c128_i32_11 = arith.constant 128 : i32
      %97 = vector.broadcast %c128_i32_11 : i32 to vector<1x256xi32>
      %98 = arith.cmpi sge, %0, %97 : vector<1x256xi32>
      %c144_i32 = arith.constant 144 : i32
      %99 = vector.broadcast %c144_i32 : i32 to vector<1x256xi32>
      %100 = arith.cmpi slt, %0, %99 : vector<1x256xi32>
      %101 = arith.andi %98, %100 : vector<1x256xi1>
      %102 = vector.extract_strided_slice %7 {offsets = [0, 8], sizes = [32, 1], strides = [1, 1]} : vector<32x16xf32> to vector<32x1xf32>
      %103 = vector.shape_cast %101 : vector<1x256xi1> to vector<1x256xi1>
      %104 = vector.broadcast %103 : vector<1x256xi1> to vector<32x256xi1>
      %105 = vector.shape_cast %102 : vector<32x1xf32> to vector<32x1xf32>
      %106 = vector.broadcast %105 : vector<32x1xf32> to vector<32x256xf32>
      %107 = arith.select %104, %106, %96 : vector<32x256xi1>, vector<32x256xf32>
      %c144_i32_12 = arith.constant 144 : i32
      %108 = vector.broadcast %c144_i32_12 : i32 to vector<1x256xi32>
      %109 = arith.cmpi sge, %0, %108 : vector<1x256xi32>
      %c160_i32 = arith.constant 160 : i32
      %110 = vector.broadcast %c160_i32 : i32 to vector<1x256xi32>
      %111 = arith.cmpi slt, %0, %110 : vector<1x256xi32>
      %112 = arith.andi %109, %111 : vector<1x256xi1>
      %113 = vector.extract_strided_slice %7 {offsets = [0, 9], sizes = [32, 1], strides = [1, 1]} : vector<32x16xf32> to vector<32x1xf32>
      %114 = vector.shape_cast %112 : vector<1x256xi1> to vector<1x256xi1>
      %115 = vector.broadcast %114 : vector<1x256xi1> to vector<32x256xi1>
      %116 = vector.shape_cast %113 : vector<32x1xf32> to vector<32x1xf32>
      %117 = vector.broadcast %116 : vector<32x1xf32> to vector<32x256xf32>
      %118 = arith.select %115, %117, %107 : vector<32x256xi1>, vector<32x256xf32>
      %c160_i32_13 = arith.constant 160 : i32
      %119 = vector.broadcast %c160_i32_13 : i32 to vector<1x256xi32>
      %120 = arith.cmpi sge, %0, %119 : vector<1x256xi32>
      %c176_i32 = arith.constant 176 : i32
      %121 = vector.broadcast %c176_i32 : i32 to vector<1x256xi32>
      %122 = arith.cmpi slt, %0, %121 : vector<1x256xi32>
      %123 = arith.andi %120, %122 : vector<1x256xi1>
      %124 = vector.extract_strided_slice %7 {offsets = [0, 10], sizes = [32, 1], strides = [1, 1]} : vector<32x16xf32> to vector<32x1xf32>
      %125 = vector.shape_cast %123 : vector<1x256xi1> to vector<1x256xi1>
      %126 = vector.broadcast %125 : vector<1x256xi1> to vector<32x256xi1>
      %127 = vector.shape_cast %124 : vector<32x1xf32> to vector<32x1xf32>
      %128 = vector.broadcast %127 : vector<32x1xf32> to vector<32x256xf32>
      %129 = arith.select %126, %128, %118 : vector<32x256xi1>, vector<32x256xf32>
      %c176_i32_14 = arith.constant 176 : i32
      %130 = vector.broadcast %c176_i32_14 : i32 to vector<1x256xi32>
      %131 = arith.cmpi sge, %0, %130 : vector<1x256xi32>
      %c192_i32 = arith.constant 192 : i32
      %132 = vector.broadcast %c192_i32 : i32 to vector<1x256xi32>
      %133 = arith.cmpi slt, %0, %132 : vector<1x256xi32>
      %134 = arith.andi %131, %133 : vector<1x256xi1>
      %135 = vector.extract_strided_slice %7 {offsets = [0, 11], sizes = [32, 1], strides = [1, 1]} : vector<32x16xf32> to vector<32x1xf32>
      %136 = vector.shape_cast %134 : vector<1x256xi1> to vector<1x256xi1>
      %137 = vector.broadcast %136 : vector<1x256xi1> to vector<32x256xi1>
      %138 = vector.shape_cast %135 : vector<32x1xf32> to vector<32x1xf32>
      %139 = vector.broadcast %138 : vector<32x1xf32> to vector<32x256xf32>
      %140 = arith.select %137, %139, %129 : vector<32x256xi1>, vector<32x256xf32>
      %c192_i32_15 = arith.constant 192 : i32
      %141 = vector.broadcast %c192_i32_15 : i32 to vector<1x256xi32>
      %142 = arith.cmpi sge, %0, %141 : vector<1x256xi32>
      %c208_i32 = arith.constant 208 : i32
      %143 = vector.broadcast %c208_i32 : i32 to vector<1x256xi32>
      %144 = arith.cmpi slt, %0, %143 : vector<1x256xi32>
      %145 = arith.andi %142, %144 : vector<1x256xi1>
      %146 = vector.extract_strided_slice %7 {offsets = [0, 12], sizes = [32, 1], strides = [1, 1]} : vector<32x16xf32> to vector<32x1xf32>
      %147 = vector.shape_cast %145 : vector<1x256xi1> to vector<1x256xi1>
      %148 = vector.broadcast %147 : vector<1x256xi1> to vector<32x256xi1>
      %149 = vector.shape_cast %146 : vector<32x1xf32> to vector<32x1xf32>
      %150 = vector.broadcast %149 : vector<32x1xf32> to vector<32x256xf32>
      %151 = arith.select %148, %150, %140 : vector<32x256xi1>, vector<32x256xf32>
      %c208_i32_16 = arith.constant 208 : i32
      %152 = vector.broadcast %c208_i32_16 : i32 to vector<1x256xi32>
      %153 = arith.cmpi sge, %0, %152 : vector<1x256xi32>
      %c224_i32 = arith.constant 224 : i32
      %154 = vector.broadcast %c224_i32 : i32 to vector<1x256xi32>
      %155 = arith.cmpi slt, %0, %154 : vector<1x256xi32>
      %156 = arith.andi %153, %155 : vector<1x256xi1>
      %157 = vector.extract_strided_slice %7 {offsets = [0, 13], sizes = [32, 1], strides = [1, 1]} : vector<32x16xf32> to vector<32x1xf32>
      %158 = vector.shape_cast %156 : vector<1x256xi1> to vector<1x256xi1>
      %159 = vector.broadcast %158 : vector<1x256xi1> to vector<32x256xi1>
      %160 = vector.shape_cast %157 : vector<32x1xf32> to vector<32x1xf32>
      %161 = vector.broadcast %160 : vector<32x1xf32> to vector<32x256xf32>
      %162 = arith.select %159, %161, %151 : vector<32x256xi1>, vector<32x256xf32>
      %c224_i32_17 = arith.constant 224 : i32
      %163 = vector.broadcast %c224_i32_17 : i32 to vector<1x256xi32>
      %164 = arith.cmpi sge, %0, %163 : vector<1x256xi32>
      %c240_i32 = arith.constant 240 : i32
      %165 = vector.broadcast %c240_i32 : i32 to vector<1x256xi32>
      %166 = arith.cmpi slt, %0, %165 : vector<1x256xi32>
      %167 = arith.andi %164, %166 : vector<1x256xi1>
      %168 = vector.extract_strided_slice %7 {offsets = [0, 14], sizes = [32, 1], strides = [1, 1]} : vector<32x16xf32> to vector<32x1xf32>
      %169 = vector.shape_cast %167 : vector<1x256xi1> to vector<1x256xi1>
      %170 = vector.broadcast %169 : vector<1x256xi1> to vector<32x256xi1>
      %171 = vector.shape_cast %168 : vector<32x1xf32> to vector<32x1xf32>
      %172 = vector.broadcast %171 : vector<32x1xf32> to vector<32x256xf32>
      %173 = arith.select %170, %172, %162 : vector<32x256xi1>, vector<32x256xf32>
      %c240_i32_18 = arith.constant 240 : i32
      %174 = vector.broadcast %c240_i32_18 : i32 to vector<1x256xi32>
      %175 = arith.cmpi sge, %0, %174 : vector<1x256xi32>
      %c256_i32 = arith.constant 256 : i32
      %176 = vector.broadcast %c256_i32 : i32 to vector<1x256xi32>
      %177 = arith.cmpi slt, %0, %176 : vector<1x256xi32>
      %178 = arith.andi %175, %177 : vector<1x256xi1>
      %179 = vector.extract_strided_slice %7 {offsets = [0, 15], sizes = [32, 1], strides = [1, 1]} : vector<32x16xf32> to vector<32x1xf32>
      %180 = vector.shape_cast %178 : vector<1x256xi1> to vector<1x256xi1>
      %181 = vector.broadcast %180 : vector<1x256xi1> to vector<32x256xi1>
      %182 = vector.shape_cast %179 : vector<32x1xf32> to vector<32x1xf32>
      %183 = vector.broadcast %182 : vector<32x1xf32> to vector<32x256xf32>
      %184 = arith.select %181, %183, %173 : vector<32x256xi1>, vector<32x256xf32>
      %c0_19 = arith.constant 0 : index
      %c0_20 = arith.constant 0 : index
      %185 = vector.load %arg3[%c0_19, %c0_20] : memref<32x256xf32, #tpu.memory_space<vmem>>, vector<32x256xf32>
      tpu.vector_store %arg3[%c0_19, %c0_20], %184 {strides = array<i32>} : memref<32x256xf32, #tpu.memory_space<vmem>>, vector<32x256xf32>,
    } else {
    }
    return
  }
  func.func @transform_0(%arg0: i32) -> (i32, i32) {
    %c0_i32 = arith.constant 0 : i32
    %c0_i32_0 = arith.constant 0 : i32
    %c0_i32_1 = arith.constant 0 : i32
    return %c0_i32, %c0_i32_0 : i32, i32
  }
  func.func @transform_1(%arg0: i32) -> (i32, i32) {
    %c0_i32 = arith.constant 0 : i32
    %c0_i32_0 = arith.constant 0 : i32
    %c0_i32_1 = arith.constant 0 : i32
    return %c0_i32, %c0_i32_0 : i32, i32
  }
  func.func @transform_2(%arg0: i32) -> (i32, i32) {
    %c0_i32 = arith.constant 0 : i32
    %c0_i32_0 = arith.constant 0 : i32
    return %arg0, %c0_i32 : i32, i32
  }
}

</mosaic_0001>

<llo_original>
// kernel: tpu_custom_call.1
$region0: #{tpu_custom_call.1}
  #allocation0 [shape = 'u32[]', space=smem, size = 0x4, offset = 0x4, fixed_abs, tag = 'smem constant byte address 0x4 - core index']
  #allocation1 [shape = 'u32[144,128]{1,0:T(1,128)}', space=vmem, size = 0x12000, scoped, tag = 'internal scratch']
  %s0 = inlined_call_operand.vmem [shape: f32[32,16], index: 0, kind: input, shape index: {}]
  %s1 = inlined_call_operand.vmem [shape: f32[32,16], index: 1, kind: input, shape index: {}]
  %s2 = inlined_call_operand.hbm [shape: f32[64,256], index: 2, kind: output, shape index: {}]
  %s3 = sld [smem:[#allocation0]]
  $region49: #{tpu_custom_call.1} parent=0
    _
  %s5 = ssub.s32 1, %s3
  %s6 = scalar_select 0, %s5, %s3
  $region1: #{tpu_custom_call.1} parent=0
    #allocation2 [shape = 'u8[65536]{0}', space=vmem, size = 0x10000, scoped, tag = 'output window, operand 0']
    #allocation3 [shape = 's32[2]{0}', space=sflag, size = 0x8, scoped, tag = 'scoped memory for tpu_custom_call.1']
    %7 = vsyncpa [#allocation3], 0
    %s8 = scalar_lea.sflag [#allocation3], 1
    %9 = vsyncpa %s8, 0
    loop: start=0, step=1, limit=4
    $region2: #{tpu_custom_call.1} parent=1 // loop_pre_header
      _
    $region3: #{tpu_custom_call.1} parent=1 // loop_header
      %s11 = sphi 0, %s15
      %p12 = scmp.ge.s32.totalorder %s11, 4
      %s19 = sphi 0, %s19
      %s21 = sphi 0, %s19
      %s22 = sphi 0, %s21
      %s36 = sphi 0, %s22
      %s40 = sphi 0, %s40
      %s42 = sphi 0, %s40
      %s43 = sphi 0, %s42
      %s57 = sphi 0, %s43
      %s63 = sphi 0, %s65
      %s66 = sphi 0, %s63
      %s67 = sphi 0, %s66
      %s83 = sphi 0, %s67
    $region4: #{tpu_custom_call.1} parent=1 // loop_header_branch
      %14 = sbr.rel (%p12) target = $region8
    $region5: #{tpu_custom_call.1} parent=1 // loop_body
      %s16 = ssub.s32 %s11, 1
      %s17 = ssub.s32 %s11, 2
      %s18 = sadd.s32 %s11, 1
      %s20 = sadd.s32 %s19, 1
      %p23 = scmp.eq.s32.totalorder %s11, 1
      %p24 = scmp.ne.s32.totalorder %s19, %s21
      %p25 = scmp.eq.s32.totalorder %s11, 0
      %p26 = por %p24, %p25
      %p27 = scmp.ne.s32.totalorder %s19, %s21
      %p28 = scmp.eq.s32.totalorder %s16, 1
      %p29 = por %p27, %p28
      %p30 = scmp.ne.s32.totalorder %s21, %s22
      %p31 = scmp.eq.s32.totalorder %s16, 0
      %p32 = por %p30, %p31
      %p33 = scmp.ne.s32.totalorder %s21, %s22
      %p34 = scmp.eq.s32.totalorder %s17, 1
      %p35 = por %p33, %p34
      %p37 = scmp.ne.s32.totalorder %s22, %s36
      %p38 = scmp.eq.s32.totalorder %s17, 0
      %p39 = por %p37, %p38
      %s41 = sadd.s32 %s40, 1
      %p44 = scmp.eq.s32.totalorder %s11, 1
      %p45 = scmp.ne.s32.totalorder %s40, %s42
      %p46 = scmp.eq.s32.totalorder %s11, 0
      %p47 = por %p45, %p46
      %p48 = scmp.ne.s32.totalorder %s40, %s42
      %p49 = scmp.eq.s32.totalorder %s16, 1
      %p50 = por %p48, %p49
      %p51 = scmp.ne.s32.totalorder %s42, %s43
      %p52 = scmp.eq.s32.totalorder %s16, 0
      %p53 = por %p51, %p52
      %p54 = scmp.ne.s32.totalorder %s42, %s43
      %p55 = scmp.eq.s32.totalorder %s17, 1
      %p56 = por %p54, %p55
      %p58 = scmp.ne.s32.totalorder %s43, %s57
      %p59 = scmp.eq.s32.totalorder %s17, 0
      %p60 = por %p58, %p59
      %s61 = ssub.s32 %s11, %s18
      %p62 = scmp.eq.s32.totalorder %s61, 0
      %s64 = sadd.s32 %s63, 1
      %s65 = scalar_select %p62, %s63, %s64
      %p68 = pneg %p62
      %p69 = scmp.eq.s32.totalorder %s11, 1
      %p70 = por %p68, %p69
      %p71 = scmp.ne.s32.totalorder %s63, %s66
      %p72 = scmp.eq.s32.totalorder %s11, 0
      %p73 = por %p71, %p72
      %p74 = scmp.ne.s32.totalorder %s63, %s66
      %p75 = scmp.eq.s32.totalorder %s16, 1
      %p76 = por %p74, %p75
      %p77 = scmp.ne.s32.totalorder %s66, %s67
      %p78 = scmp.eq.s32.totalorder %s16, 0
      %p79 = por %p77, %p78
      %p80 = scmp.ne.s32.totalorder %s66, %s67
      %p81 = scmp.eq.s32.totalorder %s17, 1
      %p82 = por %p80, %p81
      %p84 = scmp.ne.s32.totalorder %s67, %s83
      %p85 = scmp.eq.s32.totalorder %s17, 0
      %p86 = por %p84, %p85
      %p87 = scmp.le.s32.totalorder 1, %s11
      %p88 = scmp.lt.s32.totalorder %s11, 3
      %p89 = pnand %p87, %p88
      %p90 = pneg %p89
      // Predicated region
      $region9: #{tpu_custom_call.1} parent=5 // pred_check
        _
      $region10: #{tpu_custom_call.1} parent=5 // pred_check_branch
        %92 = sbr.rel (%p89) target = $region12
      $region11: #{tpu_custom_call.1} parent=5 // pred_region
        %s93 = ssub.s32 %s11, 1
        // Predicated region
        $region13: #{tpu_custom_call.1} parent=11 // pred_check
          %p94 = pneg %p32
        $region14: #{tpu_custom_call.1} parent=11 // pred_check_branch
          %96 = sbr.rel (%p94) target = $region16
        $region15: #{tpu_custom_call.1} parent=11 // pred_region
          _
        $region16: #{tpu_custom_call.1} parent=11 // pred_fallthru
          _
        // Predicated region
        $region17: #{tpu_custom_call.1} parent=11 // pred_check
          %p97 = pneg %p53
        $region18: #{tpu_custom_call.1} parent=11 // pred_check_branch
          %99 = sbr.rel (%p97) target = $region20
        $region19: #{tpu_custom_call.1} parent=11 // pred_region
          _
        $region20: #{tpu_custom_call.1} parent=11 // pred_fallthru
          _
      $region12: #{tpu_custom_call.1} parent=5 // pred_fallthru
        _
      %p100 = scmp.lt.s32.totalorder %s11, 2
      // Predicated region
      $region21: #{tpu_custom_call.1} parent=5 // pred_check
        %p101 = pneg %p100
      $region22: #{tpu_custom_call.1} parent=5 // pred_check_branch
        %103 = sbr.rel (%p101) target = $region24
      $region23: #{tpu_custom_call.1} parent=5 // pred_region
        _
      $region24: #{tpu_custom_call.1} parent=5 // pred_fallthru
        _
      %p104 = scmp.le.s32.totalorder 1, %s11
      %p105 = scmp.lt.s32.totalorder %s11, 3
      %p106 = pnand %p104, %p105
      %p107 = pneg %p106
      // Predicated region
      $region25: #{tpu_custom_call.1} parent=5 // pred_check
        _
      $region26: #{tpu_custom_call.1} parent=5 // pred_check_branch
        %109 = sbr.rel (%p106) target = $region28
      $region27: #{tpu_custom_call.1} parent=5 // pred_region
        %s110 = ssub.s32 %s11, 1
        %p111 = pneg %p32
        %p112 = pneg %p29
        %p113 = pneg %p53
        %p114 = pneg %p50
        %p115 = pneg %p79
        %p116 = pneg %p76
        %s117 = sand.u32 %s66, 1
        %s118 = scalar_lea.sflag [#allocation3], %s117
        %s119 = sand.u32 %s66, 1
        %s120 = smul.addr %s119, 64
        %s121 = scalar_lea.vmem [#allocation2], %s120
        %s122 = smul.u32 4, %s16
        %v123 = vlaneseq
        %v124 = vand.u32 %v123, 127
        %v125 = vadd.s32 %v124, 128
        %p126 = scmp.eq.s32.totalorder %s16, 0
        // Predicated region
        $region29: #{tpu_custom_call.1} parent=27 // pred_check
          %p127 = pneg %p126
        $region30: #{tpu_custom_call.1} parent=27 // pred_check_branch
          %129 = sbr.rel (%p127) target = $region32
        $region31: #{tpu_custom_call.1} parent=27 // pred_region
          %vm130 = vcmp.ge.s32.totalorder %v124, 16
          %vm131 = vcmp.ge.s32.totalorder %v125, 16
          %v132 = vsel %vm130, 1, 0
          %v133 = vsel %vm131, 1, 0
          %vm134 = vcmp.ge.s32.totalorder %v124, 32
          %vm135 = vcmp.ge.s32.totalorder %v125, 32
          %v136 = vsel %vm134, 1, 0
          %v137 = vsel %vm135, 1, 0
          %v138 = vadd.s32 %v132, %v136
          %v139 = vadd.s32 %v133, %v137
          %vm140 = vcmp.ge.s32.totalorder %v124, 48
          %vm141 = vcmp.ge.s32.totalorder %v125, 48
          %v142 = vsel %vm140, 1, 0
          %v143 = vsel %vm141, 1, 0
          %v144 = vadd.s32 %v138, %v142
          %v145 = vadd.s32 %v139, %v143
          %vm146 = vcmp.ge.s32.totalorder %v124, 64
          %vm147 = vcmp.ge.s32.totalorder %v125, 64
          %v148 = vsel %vm146, 1, 0
          %v149 = vsel %vm147, 1, 0
          %v150 = vadd.s32 %v144, %v148
          %v151 = vadd.s32 %v145, %v149
          %vm152 = vcmp.ge.s32.totalorder %v124, 80
          %vm153 = vcmp.ge.s32.totalorder %v125, 80
          %v154 = vsel %vm152, 1, 0
          %v155 = vsel %vm153, 1, 0
          %v156 = vadd.s32 %v150, %v154
          %v157 = vadd.s32 %v151, %v155
          %vm158 = vcmp.ge.s32.totalorder %v124, 96
          %vm159 = vcmp.ge.s32.totalorder %v125, 96
          %v160 = vsel %vm158, 1, 0
          %v161 = vsel %vm159, 1, 0
          %v162 = vadd.s32 %v156, %v160
          %v163 = vadd.s32 %v157, %v161
          %vm164 = vcmp.ge.s32.totalorder %v124, 112
          %vm165 = vcmp.ge.s32.totalorder %v125, 112
          %v166 = vsel %vm164, 1, 0
          %v167 = vsel %vm165, 1, 0
          %v168 = vadd.s32 %v162, %v166
          %v169 = vadd.s32 %v163, %v167
          %vm170 = vcmp.ge.s32.totalorder %v124, 128
          %vm171 = vcmp.ge.s32.totalorder %v125, 128
          %v172 = vsel %vm170, 1, 0
          %v173 = vsel %vm171, 1, 0
          %v174 = vadd.s32 %v168, %v172
          %v175 = vadd.s32 %v169, %v173
          %vm176 = vcmp.ge.s32.totalorder %v124, 144
          %vm177 = vcmp.ge.s32.totalorder %v125, 144
          %v178 = vsel %vm176, 1, 0
          %v179 = vsel %vm177, 1, 0
          %v180 = vadd.s32 %v174, %v178
          %v181 = vadd.s32 %v175, %v179
          %vm182 = vcmp.ge.s32.totalorder %v124, 160
          %vm183 = vcmp.ge.s32.totalorder %v125, 160
          %v184 = vsel %vm182, 1, 0
          %v185 = vsel %vm183, 1, 0
          %v186 = vadd.s32 %v180, %v184
          %v187 = vadd.s32 %v181, %v185
          %vm188 = vcmp.ge.s32.totalorder %v124, 176
          %vm189 = vcmp.ge.s32.totalorder %v125, 176
          %v190 = vsel %vm188, 1, 0
          %v191 = vsel %vm189, 1, 0
          %v192 = vadd.s32 %v186, %v190
          %v193 = vadd.s32 %v187, %v191
          %vm194 = vcmp.ge.s32.totalorder %v124, 192
          %vm195 = vcmp.ge.s32.totalorder %v125, 192
          %v196 = vsel %vm194, 1, 0
          %v197 = vsel %vm195, 1, 0
          %v198 = vadd.s32 %v192, %v196
          %v199 = vadd.s32 %v193, %v197
          %vm200 = vcmp.ge.s32.totalorder %v124, 208
          %vm201 = vcmp.ge.s32.totalorder %v125, 208
          %v202 = vsel %vm200, 1, 0
          %v203 = vsel %vm201, 1, 0
          %v204 = vadd.s32 %v198, %v202
          %v205 = vadd.s32 %v199, %v203
          %vm206 = vcmp.ge.s32.totalorder %v124, 224
          %vm207 = vcmp.ge.s32.totalorder %v125, 224
          %v208 = vsel %vm206, 1, 0
          %v209 = vsel %vm207, 1, 0
          %v210 = vadd.s32 %v204, %v208
          %v211 = vadd.s32 %v205, %v209
          %vm212 = vcmp.ge.s32.totalorder %v124, 240
          %vm213 = vcmp.ge.s32.totalorder %v125, 240
          %v214 = vsel %vm212, 1, 0
          %v215 = vsel %vm213, 1, 0
          %v216 = vadd.s32 %v210, %v214
          %v217 = vadd.s32 %v211, %v215
          %v218 = vmul.u32 %v216, 16
          %v219 = vmul.u32 %v217, 16
          %v220 = vsub.s32 %v124, %v218
          %v221 = vsub.s32 %v125, %v219
          %v222 = vld [vmem:[%s0] sm:$0xff]
          %v223 = vld [vmem:[%s0 + $0x8] sm:$0xff]
          %v224 = vld [vmem:[%s0 + $0x10] sm:$0xff]
          %v225 = vld [vmem:[%s0 + $0x18] sm:$0xff]
          %vm226 = vcmp.eq.s32.totalorder %v220, 0
          %vm227 = vcmp.eq.s32.totalorder %v221, 0
          %v228 = vsel %vm226, 1, 0
          %v229 = vsel %vm227, 1, 0
          %vm230 = vcmp.eq.s32.totalorder %v228, 1
          %vm231 = vcmp.eq.s32.totalorder %v229, 1
          %233 = vset.pattern.permute.xlu0 0
          %234 = vperm.xlu0 %233, %v222
          %v235 = vpop.permute.xlu0 %234
          %238 = vset.pattern.permute.xlu0 0
          %239 = vperm.xlu0 %238, %v223
          %v240 = vpop.permute.xlu0 %239
          %243 = vset.pattern.permute.xlu0 0
          %244 = vperm.xlu0 %243, %v224
          %v245 = vpop.permute.xlu0 %244
          %248 = vset.pattern.permute.xlu0 0
          %249 = vperm.xlu0 %248, %v225
          %v250 = vpop.permute.xlu0 %249
          %v252 = vsel %vm230, %v235, 0.0
          %v253 = vsel %vm231, %v235, 0.0
          %v254 = vsel %vm230, %v240, 0.0
          %v255 = vsel %vm231, %v240, 0.0
          %v256 = vsel %vm230, %v245, 0.0
          %v257 = vsel %vm231, %v245, 0.0
          %v258 = vsel %vm230, %v250, 0.0
          %v259 = vsel %vm231, %v250, 0.0
          %vm260 = vcmp.eq.s32.totalorder %v220, 1
          %vm261 = vcmp.eq.s32.totalorder %v221, 1
          %v262 = vsel %vm260, 1, 0
          %v263 = vsel %vm261, 1, 0
          %vm264 = vcmp.eq.s32.totalorder %v262, 1
          %vm265 = vcmp.eq.s32.totalorder %v263, 1
          %266 = vset.pattern.permute.xlu0 1
          %267 = vperm.xlu0 %266, %v222
          %v268 = vpop.permute.xlu0 %267
          %270 = vset.pattern.permute.xlu0 1
          %271 = vperm.xlu0 %270, %v223
          %v272 = vpop.permute.xlu0 %271
          %274 = vset.pattern.permute.xlu0 1
          %275 = vperm.xlu0 %274, %v224
          %v276 = vpop.permute.xlu0 %275
          %278 = vset.pattern.permute.xlu0 1
          %279 = vperm.xlu0 %278, %v225
          %v280 = vpop.permute.xlu0 %279
          %v282 = vsel %vm264, %v268, %v252
          %v283 = vsel %vm265, %v268, %v253
          %v284 = vsel %vm264, %v272, %v254
          %v285 = vsel %vm265, %v272, %v255
          %v286 = vsel %vm264, %v276, %v256
          %v287 = vsel %vm265, %v276, %v257
          %v288 = vsel %vm264, %v280, %v258
          %v289 = vsel %vm265, %v280, %v259
          %vm290 = vcmp.eq.s32.totalorder %v220, 2
          %vm291 = vcmp.eq.s32.totalorder %v221, 2
          %v292 = vsel %vm290, 1, 0
          %v293 = vsel %vm291, 1, 0
          %vm294 = vcmp.eq.s32.totalorder %v292, 1
          %vm295 = vcmp.eq.s32.totalorder %v293, 1
          %296 = vset.pattern.permute.xlu0 2
          %297 = vperm.xlu0 %296, %v222
          %v298 = vpop.permute.xlu0 %297
          %300 = vset.pattern.permute.xlu0 2
          %301 = vperm.xlu0 %300, %v223
          %v302 = vpop.permute.xlu0 %301
          %304 = vset.pattern.permute.xlu0 2
          %305 = vperm.xlu0 %304, %v224
          %v306 = vpop.permute.xlu0 %305
          %308 = vset.pattern.permute.xlu0 2
          %309 = vperm.xlu0 %308, %v225
          %v310 = vpop.permute.xlu0 %309
          %v312 = vsel %vm294, %v298, %v282
          %v313 = vsel %vm295, %v298, %v283
          %v314 = vsel %vm294, %v302, %v284
          %v315 = vsel %vm295, %v302, %v285
          %v316 = vsel %vm294, %v306, %v286
          %v317 = vsel %vm295, %v306, %v287
          %v318 = vsel %vm294, %v310, %v288
          %v319 = vsel %vm295, %v310, %v289
          %vm320 = vcmp.eq.s32.totalorder %v220, 3
          %vm321 = vcmp.eq.s32.totalorder %v221, 3
          %v322 = vsel %vm320, 1, 0
          %v323 = vsel %vm321, 1, 0
          %vm324 = vcmp.eq.s32.totalorder %v322, 1
          %vm325 = vcmp.eq.s32.totalorder %v323, 1
          %326 = vset.pattern.permute.xlu0 3
          %327 = vperm.xlu0 %326, %v222
          %v328 = vpop.permute.xlu0 %327
          %330 = vset.pattern.permute.xlu0 3
          %331 = vperm.xlu0 %330, %v223
          %v332 = vpop.permute.xlu0 %331
          %334 = vset.pattern.permute.xlu0 3
          %335 = vperm.xlu0 %334, %v224
          %v336 = vpop.permute.xlu0 %335
          %338 = vset.pattern.permute.xlu0 3
          %339 = vperm.xlu0 %338, %v225
          %v340 = vpop.permute.xlu0 %339
          %v342 = vsel %vm324, %v328, %v312
          %v343 = vsel %vm325, %v328, %v313
          %v344 = vsel %vm324, %v332, %v314
          %v345 = vsel %vm325, %v332, %v315
          %v346 = vsel %vm324, %v336, %v316
          %v347 = vsel %vm325, %v336, %v317
          %v348 = vsel %vm324, %v340, %v318
          %v349 = vsel %vm325, %v340, %v319
          %vm350 = vcmp.eq.s32.totalorder %v220, 4
          %vm351 = vcmp.eq.s32.totalorder %v221, 4
          %v352 = vsel %vm350, 1, 0
          %v353 = vsel %vm351, 1, 0
          %vm354 = vcmp.eq.s32.totalorder %v352, 1
          %vm355 = vcmp.eq.s32.totalorder %v353, 1
          %356 = vset.pattern.permute.xlu0 4
          %357 = vperm.xlu0 %356, %v222
          %v358 = vpop.permute.xlu0 %357
          %360 = vset.pattern.permute.xlu0 4
          %361 = vperm.xlu0 %360, %v223
          %v362 = vpop.permute.xlu0 %361
          %364 = vset.pattern.permute.xlu0 4
          %365 = vperm.xlu0 %364, %v224
          %v366 = vpop.permute.xlu0 %365
          %368 = vset.pattern.permute.xlu0 4
          %369 = vperm.xlu0 %368, %v225
          %v370 = vpop.permute.xlu0 %369
          %v372 = vsel %vm354, %v358, %v342
          %v373 = vsel %vm355, %v358, %v343
          %v374 = vsel %vm354, %v362, %v344
          %v375 = vsel %vm355, %v362, %v345
          %v376 = vsel %vm354, %v366, %v346
          %v377 = vsel %vm355, %v366, %v347
          %v378 = vsel %vm354, %v370, %v348
          %v379 = vsel %vm355, %v370, %v349
          %vm380 = vcmp.eq.s32.totalorder %v220, 5
          %vm381 = vcmp.eq.s32.totalorder %v221, 5
          %v382 = vsel %vm380, 1, 0
          %v383 = vsel %vm381, 1, 0
          %vm384 = vcmp.eq.s32.totalorder %v382, 1
          %vm385 = vcmp.eq.s32.totalorder %v383, 1
          %386 = vset.pattern.permute.xlu0 5
          %387 = vperm.xlu0 %386, %v222
          %v388 = vpop.permute.xlu0 %387
          %390 = vset.pattern.permute.xlu0 5
          %391 = vperm.xlu0 %390, %v223
          %v392 = vpop.permute.xlu0 %391
          %394 = vset.pattern.permute.xlu0 5
          %395 = vperm.xlu0 %394, %v224
          %v396 = vpop.permute.xlu0 %395
          %398 = vset.pattern.permute.xlu0 5
          %399 = vperm.xlu0 %398, %v225
          %v400 = vpop.permute.xlu0 %399
          %v402 = vsel %vm384, %v388, %v372
          %v403 = vsel %vm385, %v388, %v373
          %v404 = vsel %vm384, %v392, %v374
          %v405 = vsel %vm385, %v392, %v375
          %v406 = vsel %vm384, %v396, %v376
          %v407 = vsel %vm385, %v396, %v377
          %v408 = vsel %vm384, %v400, %v378
          %v409 = vsel %vm385, %v400, %v379
          %vm410 = vcmp.eq.s32.totalorder %v220, 6
          %vm411 = vcmp.eq.s32.totalorder %v221, 6
          %v412 = vsel %vm410, 1, 0
          %v413 = vsel %vm411, 1, 0
          %vm414 = vcmp.eq.s32.totalorder %v412, 1
          %vm415 = vcmp.eq.s32.totalorder %v413, 1
          %416 = vset.pattern.permute.xlu0 6
          %417 = vperm.xlu0 %416, %v222
          %v418 = vpop.permute.xlu0 %417
          %420 = vset.pattern.permute.xlu0 6
          %421 = vperm.xlu0 %420, %v223
          %v422 = vpop.permute.xlu0 %421
          %424 = vset.pattern.permute.xlu0 6
          %425 = vperm.xlu0 %424, %v224
          %v426 = vpop.permute.xlu0 %425
          %428 = vset.pattern.permute.xlu0 6
          %429 = vperm.xlu0 %428, %v225
          %v430 = vpop.permute.xlu0 %429
          %v432 = vsel %vm414, %v418, %v402
          %v433 = vsel %vm415, %v418, %v403
          %v434 = vsel %vm414, %v422, %v404
          %v435 = vsel %vm415, %v422, %v405
          %v436 = vsel %vm414, %v426, %v406
          %v437 = vsel %vm415, %v426, %v407
          %v438 = vsel %vm414, %v430, %v408
          %v439 = vsel %vm415, %v430, %v409
          %vm440 = vcmp.eq.s32.totalorder %v220, 7
          %vm441 = vcmp.eq.s32.totalorder %v221, 7
          %v442 = vsel %vm440, 1, 0
          %v443 = vsel %vm441, 1, 0
          %vm444 = vcmp.eq.s32.totalorder %v442, 1
          %vm445 = vcmp.eq.s32.totalorder %v443, 1
          %446 = vset.pattern.permute.xlu0 7
          %447 = vperm.xlu0 %446, %v222
          %v448 = vpop.permute.xlu0 %447
          %450 = vset.pattern.permute.xlu0 7
          %451 = vperm.xlu0 %450, %v223
          %v452 = vpop.permute.xlu0 %451
          %454 = vset.pattern.permute.xlu0 7
          %455 = vperm.xlu0 %454, %v224
          %v456 = vpop.permute.xlu0 %455
          %458 = vset.pattern.permute.xlu0 7
          %459 = vperm.xlu0 %458, %v225
          %v460 = vpop.permute.xlu0 %459
          %v462 = vsel %vm444, %v448, %v432
          %v463 = vsel %vm445, %v448, %v433
          %v464 = vsel %vm444, %v452, %v434
          %v465 = vsel %vm445, %v452, %v435
          %v466 = vsel %vm444, %v456, %v436
          %v467 = vsel %vm445, %v456, %v437
          %v468 = vsel %vm444, %v460, %v438
          %v469 = vsel %vm445, %v460, %v439
          %vm470 = vcmp.eq.s32.totalorder %v220, 8
          %vm471 = vcmp.eq.s32.totalorder %v221, 8
          %v472 = vsel %vm470, 1, 0
          %v473 = vsel %vm471, 1, 0
          %vm474 = vcmp.eq.s32.totalorder %v472, 1
          %vm475 = vcmp.eq.s32.totalorder %v473, 1
          %476 = vset.pattern.permute.xlu0 8
          %477 = vperm.xlu0 %476, %v222
          %v478 = vpop.permute.xlu0 %477
          %480 = vset.pattern.permute.xlu0 8
          %481 = vperm.xlu0 %480, %v223
          %v482 = vpop.permute.xlu0 %481
          %484 = vset.pattern.permute.xlu0 8
          %485 = vperm.xlu0 %484, %v224
          %v486 = vpop.permute.xlu0 %485
          %488 = vset.pattern.permute.xlu0 8
          %489 = vperm.xlu0 %488, %v225
          %v490 = vpop.permute.xlu0 %489
          %v492 = vsel %vm474, %v478, %v462
          %v493 = vsel %vm475, %v478, %v463
          %v494 = vsel %vm474, %v482, %v464
          %v495 = vsel %vm475, %v482, %v465
          %v496 = vsel %vm474, %v486, %v466
          %v497 = vsel %vm475, %v486, %v467
          %v498 = vsel %vm474, %v490, %v468
          %v499 = vsel %vm475, %v490, %v469
          %vm500 = vcmp.eq.s32.totalorder %v220, 9
          %vm501 = vcmp.eq.s32.totalorder %v221, 9
          %v502 = vsel %vm500, 1, 0
          %v503 = vsel %vm501, 1, 0
          %vm504 = vcmp.eq.s32.totalorder %v502, 1
          %vm505 = vcmp.eq.s32.totalorder %v503, 1
          %506 = vset.pattern.permute.xlu0 9
          %507 = vperm.xlu0 %506, %v222
          %v508 = vpop.permute.xlu0 %507
          %510 = vset.pattern.permute.xlu0 9
          %511 = vperm.xlu0 %510, %v223
          %v512 = vpop.permute.xlu0 %511
          %514 = vset.pattern.permute.xlu0 9
          %515 = vperm.xlu0 %514, %v224
          %v516 = vpop.permute.xlu0 %515
          %518 = vset.pattern.permute.xlu0 9
          %519 = vperm.xlu0 %518, %v225
          %v520 = vpop.permute.xlu0 %519
          %v522 = vsel %vm504, %v508, %v492
          %v523 = vsel %vm505, %v508, %v493
          %v524 = vsel %vm504, %v512, %v494
          %v525 = vsel %vm505, %v512, %v495
          %v526 = vsel %vm504, %v516, %v496
          %v527 = vsel %vm505, %v516, %v497
          %v528 = vsel %vm504, %v520, %v498
          %v529 = vsel %vm505, %v520, %v499
          %vm530 = vcmp.eq.s32.totalorder %v220, 10
          %vm531 = vcmp.eq.s32.totalorder %v221, 10
          %v532 = vsel %vm530, 1, 0
          %v533 = vsel %vm531, 1, 0
          %vm534 = vcmp.eq.s32.totalorder %v532, 1
          %vm535 = vcmp.eq.s32.totalorder %v533, 1
          %536 = vset.pattern.permute.xlu0 10
          %537 = vperm.xlu0 %536, %v222
          %v538 = vpop.permute.xlu0 %537
          %540 = vset.pattern.permute.xlu0 10
          %541 = vperm.xlu0 %540, %v223
          %v542 = vpop.permute.xlu0 %541
          %544 = vset.pattern.permute.xlu0 10
          %545 = vperm.xlu0 %544, %v224
          %v546 = vpop.permute.xlu0 %545
          %548 = vset.pattern.permute.xlu0 10
          %549 = vperm.xlu0 %548, %v225
          %v550 = vpop.permute.xlu0 %549
          %v552 = vsel %vm534, %v538, %v522
          %v553 = vsel %vm535, %v538, %v523
          %v554 = vsel %vm534, %v542, %v524
          %v555 = vsel %vm535, %v542, %v525
          %v556 = vsel %vm534, %v546, %v526
          %v557 = vsel %vm535, %v546, %v527
          %v558 = vsel %vm534, %v550, %v528
          %v559 = vsel %vm535, %v550, %v529
          %vm560 = vcmp.eq.s32.totalorder %v220, 11
          %vm561 = vcmp.eq.s32.totalorder %v221, 11
          %v562 = vsel %vm560, 1, 0
          %v563 = vsel %vm561, 1, 0
          %vm564 = vcmp.eq.s32.totalorder %v562, 1
          %vm565 = vcmp.eq.s32.totalorder %v563, 1
          %566 = vset.pattern.permute.xlu0 11
          %567 = vperm.xlu0 %566, %v222
          %v568 = vpop.permute.xlu0 %567
          %570 = vset.pattern.permute.xlu0 11
          %571 = vperm.xlu0 %570, %v223
          %v572 = vpop.permute.xlu0 %571
          %574 = vset.pattern.permute.xlu0 11
          %575 = vperm.xlu0 %574, %v224
          %v576 = vpop.permute.xlu0 %575
          %578 = vset.pattern.permute.xlu0 11
          %579 = vperm.xlu0 %578, %v225
          %v580 = vpop.permute.xlu0 %579
          %v582 = vsel %vm564, %v568, %v552
          %v583 = vsel %vm565, %v568, %v553
          %v584 = vsel %vm564, %v572, %v554
          %v585 = vsel %vm565, %v572, %v555
          %v586 = vsel %vm564, %v576, %v556
          %v587 = vsel %vm565, %v576, %v557
          %v588 = vsel %vm564, %v580, %v558
          %v589 = vsel %vm565, %v580, %v559
          %vm590 = vcmp.eq.s32.totalorder %v220, 12
          %vm591 = vcmp.eq.s32.totalorder %v221, 12
          %v592 = vsel %vm590, 1, 0
          %v593 = vsel %vm591, 1, 0
          %vm594 = vcmp.eq.s32.totalorder %v592, 1
          %vm595 = vcmp.eq.s32.totalorder %v593, 1
          %596 = vset.pattern.permute.xlu0 12
          %597 = vperm.xlu0 %596, %v222
          %v598 = vpop.permute.xlu0 %597
          %600 = vset.pattern.permute.xlu0 12
          %601 = vperm.xlu0 %600, %v223
          %v602 = vpop.permute.xlu0 %601
          %604 = vset.pattern.permute.xlu0 12
          %605 = vperm.xlu0 %604, %v224
          %v606 = vpop.permute.xlu0 %605
          %608 = vset.pattern.permute.xlu0 12
          %609 = vperm.xlu0 %608, %v225
          %v610 = vpop.permute.xlu0 %609
          %v612 = vsel %vm594, %v598, %v582
          %v613 = vsel %vm595, %v598, %v583
          %v614 = vsel %vm594, %v602, %v584
          %v615 = vsel %vm595, %v602, %v585
          %v616 = vsel %vm594, %v606, %v586
          %v617 = vsel %vm595, %v606, %v587
          %v618 = vsel %vm594, %v610, %v588
          %v619 = vsel %vm595, %v610, %v589
          %vm620 = vcmp.eq.s32.totalorder %v220, 13
          %vm621 = vcmp.eq.s32.totalorder %v221, 13
          %v622 = vsel %vm620, 1, 0
          %v623 = vsel %vm621, 1, 0
          %vm624 = vcmp.eq.s32.totalorder %v622, 1
          %vm625 = vcmp.eq.s32.totalorder %v623, 1
          %626 = vset.pattern.permute.xlu0 13
          %627 = vperm.xlu0 %626, %v222
          %v628 = vpop.permute.xlu0 %627
          %630 = vset.pattern.permute.xlu0 13
          %631 = vperm.xlu0 %630, %v223
          %v632 = vpop.permute.xlu0 %631
          %634 = vset.pattern.permute.xlu0 13
          %635 = vperm.xlu0 %634, %v224
          %v636 = vpop.permute.xlu0 %635
          %638 = vset.pattern.permute.xlu0 13
          %639 = vperm.xlu0 %638, %v225
          %v640 = vpop.permute.xlu0 %639
          %v642 = vsel %vm624, %v628, %v612
          %v643 = vsel %vm625, %v628, %v613
          %v644 = vsel %vm624, %v632, %v614
          %v645 = vsel %vm625, %v632, %v615
          %v646 = vsel %vm624, %v636, %v616
          %v647 = vsel %vm625, %v636, %v617
          %v648 = vsel %vm624, %v640, %v618
          %v649 = vsel %vm625, %v640, %v619
          %vm650 = vcmp.eq.s32.totalorder %v220, 14
          %vm651 = vcmp.eq.s32.totalorder %v221, 14
          %v652 = vsel %vm650, 1, 0
          %v653 = vsel %vm651, 1, 0
          %vm654 = vcmp.eq.s32.totalorder %v652, 1
          %vm655 = vcmp.eq.s32.totalorder %v653, 1
          %656 = vset.pattern.permute.xlu0 14
          %657 = vperm.xlu0 %656, %v222
          %v658 = vpop.permute.xlu0 %657
          %660 = vset.pattern.permute.xlu0 14
          %661 = vperm.xlu0 %660, %v223
          %v662 = vpop.permute.xlu0 %661
          %664 = vset.pattern.permute.xlu0 14
          %665 = vperm.xlu0 %664, %v224
          %v666 = vpop.permute.xlu0 %665
          %668 = vset.pattern.permute.xlu0 14
          %669 = vperm.xlu0 %668, %v225
          %v670 = vpop.permute.xlu0 %669
          %v672 = vsel %vm654, %v658, %v642
          %v673 = vsel %vm655, %v658, %v643
          %v674 = vsel %vm654, %v662, %v644
          %v675 = vsel %vm655, %v662, %v645
          %v676 = vsel %vm654, %v666, %v646
          %v677 = vsel %vm655, %v666, %v647
          %v678 = vsel %vm654, %v670, %v648
          %v679 = vsel %vm655, %v670, %v649
          %vm680 = vcmp.eq.s32.totalorder %v220, 15
          %vm681 = vcmp.eq.s32.totalorder %v221, 15
          %v682 = vsel %vm680, 1, 0
          %v683 = vsel %vm681, 1, 0
          %vm684 = vcmp.eq.s32.totalorder %v682, 1
          %vm685 = vcmp.eq.s32.totalorder %v683, 1
          %686 = vset.pattern.permute.xlu0 15
          %687 = vperm.xlu0 %686, %v222
          %v688 = vpop.permute.xlu0 %687
          %690 = vset.pattern.permute.xlu0 15
          %691 = vperm.xlu0 %690, %v223
          %v692 = vpop.permute.xlu0 %691
          %694 = vset.pattern.permute.xlu0 15
          %695 = vperm.xlu0 %694, %v224
          %v696 = vpop.permute.xlu0 %695
          %698 = vset.pattern.permute.xlu0 15
          %699 = vperm.xlu0 %698, %v225
          %v700 = vpop.permute.xlu0 %699
          %v702 = vsel %vm684, %v688, %v672
          %v703 = vsel %vm685, %v688, %v673
          %v704 = vsel %vm684, %v692, %v674
          %v705 = vsel %vm685, %v692, %v675
          %v706 = vsel %vm684, %v696, %v676
          %v707 = vsel %vm685, %v696, %v677
          %v708 = vsel %vm684, %v700, %v678
          %v709 = vsel %vm685, %v700, %v679
          %710 = vst [vmem:[%s121] sm:$0xff] %v702
          %711 = vst [vmem:[%s121 + $0x8] sm:$0xff] %v703
          %712 = vst [vmem:[%s121 + $0x10] sm:$0xff] %v704
          %713 = vst [vmem:[%s121 + $0x18] sm:$0xff] %v705
          %714 = vst [vmem:[%s121 + $0x20] sm:$0xff] %v706
          %715 = vst [vmem:[%s121 + $0x28] sm:$0xff] %v707
          %716 = vst [vmem:[%s121 + $0x30] sm:$0xff] %v708
          %717 = vst [vmem:[%s121 + $0x38] sm:$0xff] %v709
        $region32: #{tpu_custom_call.1} parent=27 // pred_fallthru
          _
        %p718 = scmp.eq.s32.totalorder %s16, 1
        // Predicated region
        $region33: #{tpu_custom_call.1} parent=27 // pred_check
          %p719 = pneg %p718
        $region34: #{tpu_custom_call.1} parent=27 // pred_check_branch
          %721 = sbr.rel (%p719) target = $region36
        $region35: #{tpu_custom_call.1} parent=27 // pred_region
          %v722 = vld [vmem:[%s1] sm:$0xff]
          %v723 = vld [vmem:[%s1 + $0x8] sm:$0xff]
          %v724 = vld [vmem:[%s1 + $0x10] sm:$0xff]
          %v725 = vld [vmem:[%s1 + $0x18] sm:$0xff]
          %vm726 = vcmp.ge.s32.totalorder %v124, 0
          %vm727 = vcmp.ge.s32.totalorder %v125, 0
          %vm728 = vcmp.lt.s32.totalorder %v124, 16
          %vm729 = vcmp.lt.s32.totalorder %v125, 16
          %vm730 = vmand %vm726, %vm728
          %vm731 = vmand %vm727, %vm729
          %v732 = vsel %vm730, 1, 0
          %v733 = vsel %vm731, 1, 0
          %vm734 = vcmp.eq.s32.totalorder %v732, 1
          %vm735 = vcmp.eq.s32.totalorder %v733, 1
          %737 = vset.pattern.permute.xlu0 0
          %738 = vperm.xlu0 %737, %v722
          %v739 = vpop.permute.xlu0 %738
          %742 = vset.pattern.permute.xlu0 0
          %743 = vperm.xlu0 %742, %v723
          %v744 = vpop.permute.xlu0 %743
          %747 = vset.pattern.permute.xlu0 0
          %748 = vperm.xlu0 %747, %v724
          %v749 = vpop.permute.xlu0 %748
          %752 = vset.pattern.permute.xlu0 0
          %753 = vperm.xlu0 %752, %v725
          %v754 = vpop.permute.xlu0 %753
          %v756 = vsel %vm734, %v739, 0.0
          %v757 = vsel %vm735, %v739, 0.0
          %v758 = vsel %vm734, %v744, 0.0
          %v759 = vsel %vm735, %v744, 0.0
          %v760 = vsel %vm734, %v749, 0.0
          %v761 = vsel %vm735, %v749, 0.0
          %v762 = vsel %vm734, %v754, 0.0
          %v763 = vsel %vm735, %v754, 0.0
          %vm764 = vcmp.ge.s32.totalorder %v124, 16
          %vm765 = vcmp.ge.s32.totalorder %v125, 16
          %vm766 = vcmp.lt.s32.totalorder %v124, 32
          %vm767 = vcmp.lt.s32.totalorder %v125, 32
          %vm768 = vmand %vm764, %vm766
          %vm769 = vmand %vm765, %vm767
          %v770 = vsel %vm768, 1, 0
          %v771 = vsel %vm769, 1, 0
          %vm772 = vcmp.eq.s32.totalorder %v770, 1
          %vm773 = vcmp.eq.s32.totalorder %v771, 1
          %774 = vset.pattern.permute.xlu0 1
          %775 = vperm.xlu0 %774, %v722
          %v776 = vpop.permute.xlu0 %775
          %778 = vset.pattern.permute.xlu0 1
          %779 = vperm.xlu0 %778, %v723
          %v780 = vpop.permute.xlu0 %779
          %782 = vset.pattern.permute.xlu0 1
          %783 = vperm.xlu0 %782, %v724
          %v784 = vpop.permute.xlu0 %783
          %786 = vset.pattern.permute.xlu0 1
          %787 = vperm.xlu0 %786, %v725
          %v788 = vpop.permute.xlu0 %787
          %v790 = vsel %vm772, %v776, %v756
          %v791 = vsel %vm773, %v776, %v757
          %v792 = vsel %vm772, %v780, %v758
          %v793 = vsel %vm773, %v780, %v759
          %v794 = vsel %vm772, %v784, %v760
          %v795 = vsel %vm773, %v784, %v761
          %v796 = vsel %vm772, %v788, %v762
          %v797 = vsel %vm773, %v788, %v763
          %vm798 = vcmp.ge.s32.totalorder %v124, 32
          %vm799 = vcmp.ge.s32.totalorder %v125, 32
          %vm800 = vcmp.lt.s32.totalorder %v124, 48
          %vm801 = vcmp.lt.s32.totalorder %v125, 48
          %vm802 = vmand %vm798, %vm800
          %vm803 = vmand %vm799, %vm801
          %v804 = vsel %vm802, 1, 0
          %v805 = vsel %vm803, 1, 0
          %vm806 = vcmp.eq.s32.totalorder %v804, 1
          %vm807 = vcmp.eq.s32.totalorder %v805, 1
          %808 = vset.pattern.permute.xlu0 2
          %809 = vperm.xlu0 %808, %v722
          %v810 = vpop.permute.xlu0 %809
          %812 = vset.pattern.permute.xlu0 2
          %813 = vperm.xlu0 %812, %v723
          %v814 = vpop.permute.xlu0 %813
          %816 = vset.pattern.permute.xlu0 2
          %817 = vperm.xlu0 %816, %v724
          %v818 = vpop.permute.xlu0 %817
          %820 = vset.pattern.permute.xlu0 2
          %821 = vperm.xlu0 %820, %v725
          %v822 = vpop.permute.xlu0 %821
          %v824 = vsel %vm806, %v810, %v790
          %v825 = vsel %vm807, %v810, %v791
          %v826 = vsel %vm806, %v814, %v792
          %v827 = vsel %vm807, %v814, %v793
          %v828 = vsel %vm806, %v818, %v794
          %v829 = vsel %vm807, %v818, %v795
          %v830 = vsel %vm806, %v822, %v796
          %v831 = vsel %vm807, %v822, %v797
          %vm832 = vcmp.ge.s32.totalorder %v124, 48
          %vm833 = vcmp.ge.s32.totalorder %v125, 48
          %vm834 = vcmp.lt.s32.totalorder %v124, 64
          %vm835 = vcmp.lt.s32.totalorder %v125, 64
          %vm836 = vmand %vm832, %vm834
          %vm837 = vmand %vm833, %vm835
          %v838 = vsel %vm836, 1, 0
          %v839 = vsel %vm837, 1, 0
          %vm840 = vcmp.eq.s32.totalorder %v838, 1
          %vm841 = vcmp.eq.s32.totalorder %v839, 1
          %842 = vset.pattern.permute.xlu0 3
          %843 = vperm.xlu0 %842, %v722
          %v844 = vpop.permute.xlu0 %843
          %846 = vset.pattern.permute.xlu0 3
          %847 = vperm.xlu0 %846, %v723
          %v848 = vpop.permute.xlu0 %847
          %850 = vset.pattern.permute.xlu0 3
          %851 = vperm.xlu0 %850, %v724
          %v852 = vpop.permute.xlu0 %851
          %854 = vset.pattern.permute.xlu0 3
          %855 = vperm.xlu0 %854, %v725
          %v856 = vpop.permute.xlu0 %855
          %v858 = vsel %vm840, %v844, %v824
          %v859 = vsel %vm841, %v844, %v825
          %v860 = vsel %vm840, %v848, %v826
          %v861 = vsel %vm841, %v848, %v827
          %v862 = vsel %vm840, %v852, %v828
          %v863 = vsel %vm841, %v852, %v829
          %v864 = vsel %vm840, %v856, %v830
          %v865 = vsel %vm841, %v856, %v831
          %vm866 = vcmp.ge.s32.totalorder %v124, 64
          %vm867 = vcmp.ge.s32.totalorder %v125, 64
          %vm868 = vcmp.lt.s32.totalorder %v124, 80
          %vm869 = vcmp.lt.s32.totalorder %v125, 80
          %vm870 = vmand %vm866, %vm868
          %vm871 = vmand %vm867, %vm869
          %v872 = vsel %vm870, 1, 0
          %v873 = vsel %vm871, 1, 0
          %vm874 = vcmp.eq.s32.totalorder %v872, 1
          %vm875 = vcmp.eq.s32.totalorder %v873, 1
          %876 = vset.pattern.permute.xlu0 4
          %877 = vperm.xlu0 %876, %v722
          %v878 = vpop.permute.xlu0 %877
          %880 = vset.pattern.permute.xlu0 4
          %881 = vperm.xlu0 %880, %v723
          %v882 = vpop.permute.xlu0 %881
          %884 = vset.pattern.permute.xlu0 4
          %885 = vperm.xlu0 %884, %v724
          %v886 = vpop.permute.xlu0 %885
          %888 = vset.pattern.permute.xlu0 4
          %889 = vperm.xlu0 %888, %v725
          %v890 = vpop.permute.xlu0 %889
          %v892 = vsel %vm874, %v878, %v858
          %v893 = vsel %vm875, %v878, %v859
          %v894 = vsel %vm874, %v882, %v860
          %v895 = vsel %vm875, %v882, %v861
          %v896 = vsel %vm874, %v886, %v862
          %v897 = vsel %vm875, %v886, %v863
          %v898 = vsel %vm874, %v890, %v864
          %v899 = vsel %vm875, %v890, %v865
          %vm900 = vcmp.ge.s32.totalorder %v124, 80
          %vm901 = vcmp.ge.s32.totalorder %v125, 80
          %vm902 = vcmp.lt.s32.totalorder %v124, 96
          %vm903 = vcmp.lt.s32.totalorder %v125, 96
          %vm904 = vmand %vm900, %vm902
          %vm905 = vmand %vm901, %vm903
          %v906 = vsel %vm904, 1, 0
          %v907 = vsel %vm905, 1, 0
          %vm908 = vcmp.eq.s32.totalorder %v906, 1
          %vm909 = vcmp.eq.s32.totalorder %v907, 1
          %910 = vset.pattern.permute.xlu0 5
          %911 = vperm.xlu0 %910, %v722
          %v912 = vpop.permute.xlu0 %911
          %914 = vset.pattern.permute.xlu0 5
          %915 = vperm.xlu0 %914, %v723
          %v916 = vpop.permute.xlu0 %915
          %918 = vset.pattern.permute.xlu0 5
          %919 = vperm.xlu0 %918, %v724
          %v920 = vpop.permute.xlu0 %919
          %922 = vset.pattern.permute.xlu0 5
          %923 = vperm.xlu0 %922, %v725
          %v924 = vpop.permute.xlu0 %923
          %v926 = vsel %vm908, %v912, %v892
          %v927 = vsel %vm909, %v912, %v893
          %v928 = vsel %vm908, %v916, %v894
          %v929 = vsel %vm909, %v916, %v895
          %v930 = vsel %vm908, %v920, %v896
          %v931 = vsel %vm909, %v920, %v897
          %v932 = vsel %vm908, %v924, %v898
          %v933 = vsel %vm909, %v924, %v899
          %vm934 = vcmp.ge.s32.totalorder %v124, 96
          %vm935 = vcmp.ge.s32.totalorder %v125, 96
          %vm936 = vcmp.lt.s32.totalorder %v124, 112
          %vm937 = vcmp.lt.s32.totalorder %v125, 112
          %vm938 = vmand %vm934, %vm936
          %vm939 = vmand %vm935, %vm937
          %v940 = vsel %vm938, 1, 0
          %v941 = vsel %vm939, 1, 0
          %vm942 = vcmp.eq.s32.totalorder %v940, 1
          %vm943 = vcmp.eq.s32.totalorder %v941, 1
          %944 = vset.pattern.permute.xlu0 6
          %945 = vperm.xlu0 %944, %v722
          %v946 = vpop.permute.xlu0 %945
          %948 = vset.pattern.permute.xlu0 6
          %949 = vperm.xlu0 %948, %v723
          %v950 = vpop.permute.xlu0 %949
          %952 = vset.pattern.permute.xlu0 6
          %953 = vperm.xlu0 %952, %v724
          %v954 = vpop.permute.xlu0 %953
          %956 = vset.pattern.permute.xlu0 6
          %957 = vperm.xlu0 %956, %v725
          %v958 = vpop.permute.xlu0 %957
          %v960 = vsel %vm942, %v946, %v926
          %v961 = vsel %vm943, %v946, %v927
          %v962 = vsel %vm942, %v950, %v928
          %v963 = vsel %vm943, %v950, %v929
          %v964 = vsel %vm942, %v954, %v930
          %v965 = vsel %vm943, %v954, %v931
          %v966 = vsel %vm942, %v958, %v932
          %v967 = vsel %vm943, %v958, %v933
          %vm968 = vcmp.ge.s32.totalorder %v124, 112
          %vm969 = vcmp.ge.s32.totalorder %v125, 112
          %vm970 = vcmp.lt.s32.totalorder %v124, 128
          %vm971 = vcmp.lt.s32.totalorder %v125, 128
          %vm972 = vmand %vm968, %vm970
          %vm973 = vmand %vm969, %vm971
          %v974 = vsel %vm972, 1, 0
          %v975 = vsel %vm973, 1, 0
          %vm976 = vcmp.eq.s32.totalorder %v974, 1
          %vm977 = vcmp.eq.s32.totalorder %v975, 1
          %978 = vset.pattern.permute.xlu0 7
          %979 = vperm.xlu0 %978, %v722
          %v980 = vpop.permute.xlu0 %979
          %982 = vset.pattern.permute.xlu0 7
          %983 = vperm.xlu0 %982, %v723
          %v984 = vpop.permute.xlu0 %983
          %986 = vset.pattern.permute.xlu0 7
          %987 = vperm.xlu0 %986, %v724
          %v988 = vpop.permute.xlu0 %987
          %990 = vset.pattern.permute.xlu0 7
          %991 = vperm.xlu0 %990, %v725
          %v992 = vpop.permute.xlu0 %991
          %v994 = vsel %vm976, %v980, %v960
          %v995 = vsel %vm977, %v980, %v961
          %v996 = vsel %vm976, %v984, %v962
          %v997 = vsel %vm977, %v984, %v963
          %v998 = vsel %vm976, %v988, %v964
          %v999 = vsel %vm977, %v988, %v965
          %v1000 = vsel %vm976, %v992, %v966
          %v1001 = vsel %vm977, %v992, %v967
          %vm1002 = vcmp.ge.s32.totalorder %v124, 128
          %vm1003 = vcmp.ge.s32.totalorder %v125, 128
          %vm1004 = vcmp.lt.s32.totalorder %v124, 144
          %vm1005 = vcmp.lt.s32.totalorder %v125, 144
          %vm1006 = vmand %vm1002, %vm1004
          %vm1007 = vmand %vm1003, %vm1005
          %v1008 = vsel %vm1006, 1, 0
          %v1009 = vsel %vm1007, 1, 0
          %vm1010 = vcmp.eq.s32.totalorder %v1008, 1
          %vm1011 = vcmp.eq.s32.totalorder %v1009, 1
          %1012 = vset.pattern.permute.xlu0 8
          %1013 = vperm.xlu0 %1012, %v722
          %v1014 = vpop.permute.xlu0 %1013
          %1016 = vset.pattern.permute.xlu0 8
          %1017 = vperm.xlu0 %1016, %v723
          %v1018 = vpop.permute.xlu0 %1017
          %1020 = vset.pattern.permute.xlu0 8
          %1021 = vperm.xlu0 %1020, %v724
          %v1022 = vpop.permute.xlu0 %1021
          %1024 = vset.pattern.permute.xlu0 8
          %1025 = vperm.xlu0 %1024, %v725
          %v1026 = vpop.permute.xlu0 %1025
          %v1028 = vsel %vm1010, %v1014, %v994
          %v1029 = vsel %vm1011, %v1014, %v995
          %v1030 = vsel %vm1010, %v1018, %v996
          %v1031 = vsel %vm1011, %v1018, %v997
          %v1032 = vsel %vm1010, %v1022, %v998
          %v1033 = vsel %vm1011, %v1022, %v999
          %v1034 = vsel %vm1010, %v1026, %v1000
          %v1035 = vsel %vm1011, %v1026, %v1001
          %vm1036 = vcmp.ge.s32.totalorder %v124, 144
          %vm1037 = vcmp.ge.s32.totalorder %v125, 144
          %vm1038 = vcmp.lt.s32.totalorder %v124, 160
          %vm1039 = vcmp.lt.s32.totalorder %v125, 160
          %vm1040 = vmand %vm1036, %vm1038
          %vm1041 = vmand %vm1037, %vm1039
          %v1042 = vsel %vm1040, 1, 0
          %v1043 = vsel %vm1041, 1, 0
          %vm1044 = vcmp.eq.s32.totalorder %v1042, 1
          %vm1045 = vcmp.eq.s32.totalorder %v1043, 1
          %1046 = vset.pattern.permute.xlu0 9
          %1047 = vperm.xlu0 %1046, %v722
          %v1048 = vpop.permute.xlu0 %1047
          %1050 = vset.pattern.permute.xlu0 9
          %1051 = vperm.xlu0 %1050, %v723
          %v1052 = vpop.permute.xlu0 %1051
          %1054 = vset.pattern.permute.xlu0 9
          %1055 = vperm.xlu0 %1054, %v724
          %v1056 = vpop.permute.xlu0 %1055
          %1058 = vset.pattern.permute.xlu0 9
          %1059 = vperm.xlu0 %1058, %v725
          %v1060 = vpop.permute.xlu0 %1059
          %v1062 = vsel %vm1044, %v1048, %v1028
          %v1063 = vsel %vm1045, %v1048, %v1029
          %v1064 = vsel %vm1044, %v1052, %v1030
          %v1065 = vsel %vm1045, %v1052, %v1031
          %v1066 = vsel %vm1044, %v1056, %v1032
          %v1067 = vsel %vm1045, %v1056, %v1033
          %v1068 = vsel %vm1044, %v1060, %v1034
          %v1069 = vsel %vm1045, %v1060, %v1035
          %vm1070 = vcmp.ge.s32.totalorder %v124, 160
          %vm1071 = vcmp.ge.s32.totalorder %v125, 160
          %vm1072 = vcmp.lt.s32.totalorder %v124, 176
          %vm1073 = vcmp.lt.s32.totalorder %v125, 176
          %vm1074 = vmand %vm1070, %vm1072
          %vm1075 = vmand %vm1071, %vm1073
          %v1076 = vsel %vm1074, 1, 0
          %v1077 = vsel %vm1075, 1, 0
          %vm1078 = vcmp.eq.s32.totalorder %v1076, 1
          %vm1079 = vcmp.eq.s32.totalorder %v1077, 1
          %1080 = vset.pattern.permute.xlu0 10
          %1081 = vperm.xlu0 %1080, %v722
          %v1082 = vpop.permute.xlu0 %1081
          %1084 = vset.pattern.permute.xlu0 10
          %1085 = vperm.xlu0 %1084, %v723
          %v1086 = vpop.permute.xlu0 %1085
          %1088 = vset.pattern.permute.xlu0 10
          %1089 = vperm.xlu0 %1088, %v724
          %v1090 = vpop.permute.xlu0 %1089
          %1092 = vset.pattern.permute.xlu0 10
          %1093 = vperm.xlu0 %1092, %v725
          %v1094 = vpop.permute.xlu0 %1093
          %v1096 = vsel %vm1078, %v1082, %v1062
          %v1097 = vsel %vm1079, %v1082, %v1063
          %v1098 = vsel %vm1078, %v1086, %v1064
          %v1099 = vsel %vm1079, %v1086, %v1065
          %v1100 = vsel %vm1078, %v1090, %v1066
          %v1101 = vsel %vm1079, %v1090, %v1067
          %v1102 = vsel %vm1078, %v1094, %v1068
          %v1103 = vsel %vm1079, %v1094, %v1069
          %vm1104 = vcmp.ge.s32.totalorder %v124, 176
          %vm1105 = vcmp.ge.s32.totalorder %v125, 176
          %vm1106 = vcmp.lt.s32.totalorder %v124, 192
          %vm1107 = vcmp.lt.s32.totalorder %v125, 192
          %vm1108 = vmand %vm1104, %vm1106
          %vm1109 = vmand %vm1105, %vm1107
          %v1110 = vsel %vm1108, 1, 0
          %v1111 = vsel %vm1109, 1, 0
          %vm1112 = vcmp.eq.s32.totalorder %v1110, 1
          %vm1113 = vcmp.eq.s32.totalorder %v1111, 1
          %1114 = vset.pattern.permute.xlu0 11
          %1115 = vperm.xlu0 %1114, %v722
          %v1116 = vpop.permute.xlu0 %1115
          %1118 = vset.pattern.permute.xlu0 11
          %1119 = vperm.xlu0 %1118, %v723
          %v1120 = vpop.permute.xlu0 %1119
          %1122 = vset.pattern.permute.xlu0 11
          %1123 = vperm.xlu0 %1122, %v724
          %v1124 = vpop.permute.xlu0 %1123
          %1126 = vset.pattern.permute.xlu0 11
          %1127 = vperm.xlu0 %1126, %v725
          %v1128 = vpop.permute.xlu0 %1127
          %v1130 = vsel %vm1112, %v1116, %v1096
          %v1131 = vsel %vm1113, %v1116, %v1097
          %v1132 = vsel %vm1112, %v1120, %v1098
          %v1133 = vsel %vm1113, %v1120, %v1099
          %v1134 = vsel %vm1112, %v1124, %v1100
          %v1135 = vsel %vm1113, %v1124, %v1101
          %v1136 = vsel %vm1112, %v1128, %v1102
          %v1137 = vsel %vm1113, %v1128, %v1103
          %vm1138 = vcmp.ge.s32.totalorder %v124, 192
          %vm1139 = vcmp.ge.s32.totalorder %v125, 192
          %vm1140 = vcmp.lt.s32.totalorder %v124, 208
          %vm1141 = vcmp.lt.s32.totalorder %v125, 208
          %vm1142 = vmand %vm1138, %vm1140
          %vm1143 = vmand %vm1139, %vm1141
          %v1144 = vsel %vm1142, 1, 0
          %v1145 = vsel %vm1143, 1, 0
          %vm1146 = vcmp.eq.s32.totalorder %v1144, 1
          %vm1147 = vcmp.eq.s32.totalorder %v1145, 1
          %1148 = vset.pattern.permute.xlu0 12
          %1149 = vperm.xlu0 %1148, %v722
          %v1150 = vpop.permute.xlu0 %1149
          %1152 = vset.pattern.permute.xlu0 12
          %1153 = vperm.xlu0 %1152, %v723
          %v1154 = vpop.permute.xlu0 %1153
          %1156 = vset.pattern.permute.xlu0 12
          %1157 = vperm.xlu0 %1156, %v724
          %v1158 = vpop.permute.xlu0 %1157
          %1160 = vset.pattern.permute.xlu0 12
          %1161 = vperm.xlu0 %1160, %v725
          %v1162 = vpop.permute.xlu0 %1161
          %v1164 = vsel %vm1146, %v1150, %v1130
          %v1165 = vsel %vm1147, %v1150, %v1131
          %v1166 = vsel %vm1146, %v1154, %v1132
          %v1167 = vsel %vm1147, %v1154, %v1133
          %v1168 = vsel %vm1146, %v1158, %v1134
          %v1169 = vsel %vm1147, %v1158, %v1135
          %v1170 = vsel %vm1146, %v1162, %v1136
          %v1171 = vsel %vm1147, %v1162, %v1137
          %vm1172 = vcmp.ge.s32.totalorder %v124, 208
          %vm1173 = vcmp.ge.s32.totalorder %v125, 208
          %vm1174 = vcmp.lt.s32.totalorder %v124, 224
          %vm1175 = vcmp.lt.s32.totalorder %v125, 224
          %vm1176 = vmand %vm1172, %vm1174
          %vm1177 = vmand %vm1173, %vm1175
          %v1178 = vsel %vm1176, 1, 0
          %v1179 = vsel %vm1177, 1, 0
          %vm1180 = vcmp.eq.s32.totalorder %v1178, 1
          %vm1181 = vcmp.eq.s32.totalorder %v1179, 1
          %1182 = vset.pattern.permute.xlu0 13
          %1183 = vperm.xlu0 %1182, %v722
          %v1184 = vpop.permute.xlu0 %1183
          %1186 = vset.pattern.permute.xlu0 13
          %1187 = vperm.xlu0 %1186, %v723
          %v1188 = vpop.permute.xlu0 %1187
          %1190 = vset.pattern.permute.xlu0 13
          %1191 = vperm.xlu0 %1190, %v724
          %v1192 = vpop.permute.xlu0 %1191
          %1194 = vset.pattern.permute.xlu0 13
          %1195 = vperm.xlu0 %1194, %v725
          %v1196 = vpop.permute.xlu0 %1195
          %v1198 = vsel %vm1180, %v1184, %v1164
          %v1199 = vsel %vm1181, %v1184, %v1165
          %v1200 = vsel %vm1180, %v1188, %v1166
          %v1201 = vsel %vm1181, %v1188, %v1167
          %v1202 = vsel %vm1180, %v1192, %v1168
          %v1203 = vsel %vm1181, %v1192, %v1169
          %v1204 = vsel %vm1180, %v1196, %v1170
          %v1205 = vsel %vm1181, %v1196, %v1171
          %vm1206 = vcmp.ge.s32.totalorder %v124, 224
          %vm1207 = vcmp.ge.s32.totalorder %v125, 224
          %vm1208 = vcmp.lt.s32.totalorder %v124, 240
          %vm1209 = vcmp.lt.s32.totalorder %v125, 240
          %vm1210 = vmand %vm1206, %vm1208
          %vm1211 = vmand %vm1207, %vm1209
          %v1212 = vsel %vm1210, 1, 0
          %v1213 = vsel %vm1211, 1, 0
          %vm1214 = vcmp.eq.s32.totalorder %v1212, 1
          %vm1215 = vcmp.eq.s32.totalorder %v1213, 1
          %1216 = vset.pattern.permute.xlu0 14
          %1217 = vperm.xlu0 %1216, %v722
          %v1218 = vpop.permute.xlu0 %1217
          %1220 = vset.pattern.permute.xlu0 14
          %1221 = vperm.xlu0 %1220, %v723
          %v1222 = vpop.permute.xlu0 %1221
          %1224 = vset.pattern.permute.xlu0 14
          %1225 = vperm.xlu0 %1224, %v724
          %v1226 = vpop.permute.xlu0 %1225
          %1228 = vset.pattern.permute.xlu0 14
          %1229 = vperm.xlu0 %1228, %v725
          %v1230 = vpop.permute.xlu0 %1229
          %v1232 = vsel %vm1214, %v1218, %v1198
          %v1233 = vsel %vm1215, %v1218, %v1199
          %v1234 = vsel %vm1214, %v1222, %v1200
          %v1235 = vsel %vm1215, %v1222, %v1201
          %v1236 = vsel %vm1214, %v1226, %v1202
          %v1237 = vsel %vm1215, %v1226, %v1203
          %v1238 = vsel %vm1214, %v1230, %v1204
          %v1239 = vsel %vm1215, %v1230, %v1205
          %vm1240 = vcmp.ge.s32.totalorder %v124, 240
          %vm1241 = vcmp.ge.s32.totalorder %v125, 240
          %vm1242 = vcmp.lt.s32.totalorder %v124, 256
          %vm1243 = vcmp.lt.s32.totalorder %v125, 256
          %vm1244 = vmand %vm1240, %vm1242
          %vm1245 = vmand %vm1241, %vm1243
          %v1246 = vsel %vm1244, 1, 0
          %v1247 = vsel %vm1245, 1, 0
          %vm1248 = vcmp.eq.s32.totalorder %v1246, 1
          %vm1249 = vcmp.eq.s32.totalorder %v1247, 1
          %1250 = vset.pattern.permute.xlu0 15
          %1251 = vperm.xlu0 %1250, %v722
          %v1252 = vpop.permute.xlu0 %1251
          %1254 = vset.pattern.permute.xlu0 15
          %1255 = vperm.xlu0 %1254, %v723
          %v1256 = vpop.permute.xlu0 %1255
          %1258 = vset.pattern.permute.xlu0 15
          %1259 = vperm.xlu0 %1258, %v724
          %v1260 = vpop.permute.xlu0 %1259
          %1262 = vset.pattern.permute.xlu0 15
          %1263 = vperm.xlu0 %1262, %v725
          %v1264 = vpop.permute.xlu0 %1263
          %v1266 = vsel %vm1248, %v1252, %v1232
          %v1267 = vsel %vm1249, %v1252, %v1233
          %v1268 = vsel %vm1248, %v1256, %v1234
          %v1269 = vsel %vm1249, %v1256, %v1235
          %v1270 = vsel %vm1248, %v1260, %v1236
          %v1271 = vsel %vm1249, %v1260, %v1237
          %v1272 = vsel %vm1248, %v1264, %v1238
          %v1273 = vsel %vm1249, %v1264, %v1239
          %1274 = vst [vmem:[%s121] sm:$0xff] %v1266
          %1275 = vst [vmem:[%s121 + $0x8] sm:$0xff] %v1267
          %1276 = vst [vmem:[%s121 + $0x10] sm:$0xff] %v1268
          %1277 = vst [vmem:[%s121 + $0x18] sm:$0xff] %v1269
          %1278 = vst [vmem:[%s121 + $0x20] sm:$0xff] %v1270
          %1279 = vst [vmem:[%s121 + $0x28] sm:$0xff] %v1271
          %1280 = vst [vmem:[%s121 + $0x30] sm:$0xff] %v1272
          %1281 = vst [vmem:[%s121 + $0x38] sm:$0xff] %v1273
        $region36: #{tpu_custom_call.1} parent=27 // pred_fallthru
          _
        %s1282 = sand.u32 %s66, 1
        %s1283 = scalar_lea.sflag [#allocation3], %s1282
        %s1284 = sand.u32 %s66, 1
        %s1285 = smul.addr %s1284, 64
        %s1286 = scalar_lea.vmem [#allocation2], %s1285
        // Predicated region
        $region37: #{tpu_custom_call.1} parent=27 // pred_check
          %p1287 = pneg %p76
        $region38: #{tpu_custom_call.1} parent=27 // pred_check_branch
          %1289 = sbr.rel (%p1287) target = $region40
        $region39: #{tpu_custom_call.1} parent=27 // pred_region
          %s1290 = smul.u32 4, %s16
          %s1292 = ssub.s32 1024, 1024
          %1293 = vsyncadd %s1283, %s1292
          %s1294 = smul.addr %s1290, 2
          %s1295 = smul.addr %s1294, 128
          %s1296 = scalar_lea.hbm %s2, %s1295
          %s1297 = sshll.u32 %s1286, 4
          %s1298 = int_to_ptr.vmem [resolvable:$true] %s1297
          %1303 = dma.vmem_to_hbm [thread:$0]  %s1298, 1024, %s1296, %s1283, 256, 256, 16
        $region40: #{tpu_custom_call.1} parent=27 // pred_fallthru
          _
      $region28: #{tpu_custom_call.1} parent=5 // pred_fallthru
        _
      %p1304 = scmp.le.s32.totalorder 2, %s11
      // Predicated region
      $region41: #{tpu_custom_call.1} parent=5 // pred_check
        %p1305 = pneg %p1304
      $region42: #{tpu_custom_call.1} parent=5 // pred_check_branch
        %1307 = sbr.rel (%p1305) target = $region44
      $region43: #{tpu_custom_call.1} parent=5 // pred_region
        %s1308 = ssub.s32 %s11, 2
        // Predicated region
        $region45: #{tpu_custom_call.1} parent=43 // pred_check
          %p1309 = pneg %p82
        $region46: #{tpu_custom_call.1} parent=43 // pred_check_branch
          %1311 = sbr.rel (%p1309) target = $region48
        $region47: #{tpu_custom_call.1} parent=43 // pred_region
          %s1312 = sand.u32 %s67, 1
          %s1313 = scalar_lea.sflag [#allocation3], %s1312
          %s1314 = sand.u32 %s67, 1
          %s1315 = smul.addr %s1314, 64
          %s1316 = scalar_lea.vmem [#allocation2], %s1315
          %1317 = dma.done %s1313, 1024
        $region48: #{tpu_custom_call.1} parent=43 // pred_fallthru
          _
      $region44: #{tpu_custom_call.1} parent=5 // pred_fallthru
        _
    $region6: #{tpu_custom_call.1} parent=1 // loop_footer
      %s15 = sadd.s32 1, %s11
    $region7: #{tpu_custom_call.1} parent=1 // loop_footer_branch
      %10 = sbr.rel target = $region3
    $region8: #{tpu_custom_call.1} parent=1 // loop_exit
      _
    %1318 = vsyncpa [#allocation3], 1
    %s1319 = scalar_lea.sflag [#allocation3], 1
    %1320 = vsyncpa %s1319, 1

</llo_original>
